<compile_context>
chip_gen: v7x
topology: tpu7x:2x2x1
jax: 0.10.0
libtpu: 0.0.40
codegen_flags: <defaults>
</compile_context>

<pallas_src>
import functools

import numpy as np
import jax
import jax.numpy as jnp
from jax.experimental import pallas as pl
from jax.experimental.pallas import tpu as pltpu


# ---------------------------------------------------------------------------
# Fused Pallas kernel: whole DQN forward for one block of BB images.
# Layout: spatial pixels on the sublane (row) axis, channels on the lane axis.
# ---------------------------------------------------------------------------
def _dqn_kernel(patches_ref, mask9_ref, sel2_ref,
                w1_ref, b1_ref, w2_ref, b2_ref,
                fw1_ref, fb1_ref, fw2_ref, fb2_ref,
                o_ref, *, BB, H, W, S):
    f32 = jnp.float32
    bf16 = jnp.bfloat16
    H2, W2 = H // 2, W // 2
    M2 = BB * H2 * W2                       # rows after pool1 (this grid step)

    # ---- conv1 + bias + ReLU: one MXU matmul, bf16 operands, f32 accum -----
    y1 = jnp.dot(patches_ref[...], w1_ref[...], preferred_element_type=f32)
    y1 = jnp.maximum(y1 + b1_ref[...], 0.0)                     # (4*M2, C1)

    # ---- maxpool1: rows arrive in 2x2-parity-block order -> max of 4 slabs -
    pooled1 = jnp.maximum(
        jnp.maximum(y1[0 * M2:1 * M2, :], y1[1 * M2:2 * M2, :]),
        jnp.maximum(y1[2 * M2:3 * M2, :], y1[3 * M2:4 * M2, :]))  # (M2, C1)

    # ---- conv2: 9 shifted taps (row rolls + 0/1 boundary masks), ONE matmul
    # TODO(synk): swap jnp.roll (two static slices + concat) for pltpu.roll on
    #             the XLU once activation tiles grow enough to matter.
    m9 = mask9_ref[...]                                          # (M2, 9) f32
    taps = []
    for dh in range(3):
        for dw in range(3):
            k = dh * 3 + dw
            off = (dh - 1) * W2 + (dw - 1)
            t = pooled1 if off == 0 else jnp.roll(pooled1, -off, axis=0)
            if k != 4:                       # centre tap: mask is all-ones
                t = t * m9[:, k:k + 1]
            taps.append(t)
    shifted = jnp.concatenate(taps, axis=1).astype(bf16)         # (M2, 9*C1)
    y2 = jnp.dot(shifted, w2_ref[...], preferred_element_type=f32)
    y2 = jnp.maximum(y2 + b2_ref[...], 0.0)                      # (M2, C2)

    # ---- maxpool2: two row rolls + max, then one tiny 0/1 selection matmul -
    vmax = jnp.maximum(y2, jnp.roll(y2, -W2, axis=0))
    hmax = jnp.maximum(vmax, jnp.roll(vmax, -1, axis=0))
    pooled2 = jnp.dot(sel2_ref[...], hmax,
                      preferred_element_type=f32)                # (S*BB, C2)

    # ---- flatten to PyTorch NCHW (c*S + s) order as a lane-dense (BB, 512) -
    # S static row slices + one lane concat; fc1 weights are pre-permuted.
    act = jnp.concatenate(
        [pooled2[s * BB:(s + 1) * BB, :] for s in range(S)], axis=1)

    # ---- FC head: two batched, well-shaped matmuls; single output store ----
    h = jnp.dot(act.astype(bf16), fw1_ref[...], preferred_element_type=f32)
    h = jnp.maximum(h + fb1_ref[...], 0.0)                       # (BB, HID)
    o = jnp.dot(h.astype(bf16), fw2_ref[...], preferred_element_type=f32)
    o_ref[...] = o + fb2_ref[...]                                # (BB, A)


# ---------------------------------------------------------------------------
# One-time parameter re-layout (outside the jitted forward).
# ---------------------------------------------------------------------------
def prepare_params(params):
    w1, b1, w2, b2, fw1, fb1, fw2, fb2 = params
    bf = jnp.bfloat16
    C1, C2 = w1.shape[0], w2.shape[0]
    HID, A = fw2.shape[1], fw2.shape[0]
    S = fw1.shape[1] // C2
    w1t = jnp.transpose(w1.reshape(C1, 9)).astype(bf)                 # (9, C1)
    b1r = b1.reshape(1, C1)
    w2t = jnp.transpose(w2, (2, 3, 1, 0)).reshape(9 * C1, C2).astype(bf)
    b2r = b2.reshape(1, C2)
    # fc1 weight re-ordered so that input index = s*C2 + c  (s-major).
    fw1_sc = jnp.transpose(fw1.reshape(HID, C2, S), (2, 1, 0)).reshape(
        S * C2, HID).astype(bf)
    fb1r = fb1.reshape(1, HID)
    fw2t = jnp.transpose(fw2).astype(bf)                               # (HID, A)
    fb2r = fb2.reshape(1, A)
    return (w1t, b1r, w2t, b2r, fw1_sc, fb1r, fw2t, fb2r)


def _images_per_step(batch):
    # Blocks of 8 keep the output BlockSpec (8, A)-aligned; small batches run
    # in a single grid step.  TODO(synk): smarter divisor search for large,
    # non-multiple-of-8 batches.
    if batch <= 8 or batch % 8 != 0:
        return batch
    return 8


# ---------------------------------------------------------------------------
# Forward pass: tiny XLA im2col for conv1's 9 taps + one pallas_call.
# ---------------------------------------------------------------------------
@jax.jit
def dqn_forward(x_nchw, kparams):
    (w1t, b1r, w2t, b2r, fw1_sc, fb1r, fw2t, fb2r) = kparams
    B, Cin, H, W = x_nchw.shape
    assert Cin == 1 and H % 4 == 0 and W % 4 == 0
    C1 = w1t.shape[1]
    C2 = w2t.shape[1]
    HID = fw1_sc.shape[1]
    A = fw2t.shape[1]
    H2, W2, H4, W4 = H // 2, W // 2, H // 4, W // 4
    S = H4 * W4
    assert fw1_sc.shape[0] == S * C2

    BB = _images_per_step(B)
    G = B // BB
    M2b = BB * H2 * W2

    # conv1 im2col (C_in = 1 -> only 9 taps), rows emitted in
    # 2x2-parity-block-major order so in-kernel maxpool1 is pure slicing.
    xp = jnp.pad(x_nchw.reshape(B, H, W), ((0, 0), (1, 1), (1, 1)))
    taps = jnp.stack([xp[:, dh:dh + H, dw:dw + W]
                      for dh in range(3) for dw in range(3)], axis=-1)
    taps = taps.reshape(G, BB, H2, 2, W2, 2, 9)
    taps = jnp.transpose(taps, (0, 3, 5, 1, 2, 4, 6))   # (G, di, dj, b, i2, j2, 9)
    patches = taps.reshape(B * H * W, 9).astype(jnp.bfloat16)

    # Compile-time constants (numpy): conv2 boundary masks, pool2 selection.
    m = np.arange(M2b)
    i2 = (m // W2) % H2
    j2 = m % W2
    cols = []
    for dh in range(3):
        for dw in range(3):
            ok = np.ones((M2b,), np.float32)
            if dh == 0:
                ok = ok * (i2 >= 1)
            if dh == 2:
                ok = ok * (i2 <= H2 - 2)
            if dw == 0:
                ok = ok * (j2 >= 1)
            if dw == 2:
                ok = ok * (j2 <= W2 - 2)
            cols.append(ok.astype(np.float32))
    mask9 = jnp.asarray(np.stack(cols, axis=1))                   # (M2b, 9)

    sel2 = np.zeros((S * BB, M2b), np.float32)
    for s in range(S):
        i4, j4 = s // W4, s % W4
        for b in range(BB):
            sel2[s * BB + b, b * H2 * W2 + 2 * i4 * W2 + 2 * j4] = 1.0
    sel2 = jnp.asarray(sel2)                                      # (S*BB, M2b)

    kernel = functools.partial(_dqn_kernel, BB=BB, H=H, W=W, S=S)
    return pl.pallas_call(
        kernel,
        out_shape=jax.ShapeDtypeStruct((B, A), jnp.float32),
        grid=(G,),
        in_specs=[
            pl.BlockSpec((BB * H * W, 9), lambda g: (g, 0)),      # patches
            pl.BlockSpec((M2b, 9), lambda g: (0, 0)),             # conv2 masks
            pl.BlockSpec((S * BB, M2b), lambda g: (0, 0)),        # pool2 select
            pl.BlockSpec((9, C1), lambda g: (0, 0)),              # conv1 w
            pl.BlockSpec((1, C1), lambda g: (0, 0)),              # conv1 b
            pl.BlockSpec((9 * C1, C2), lambda g: (0, 0)),         # conv2 w
            pl.BlockSpec((1, C2), lambda g: (0, 0)),              # conv2 b
            pl.BlockSpec((S * C2, HID), lambda g: (0, 0)),        # fc1 w
            pl.BlockSpec((1, HID), lambda g: (0, 0)),             # fc1 b
            pl.BlockSpec((HID, A), lambda g: (0, 0)),             # fc2 w
            pl.BlockSpec((1, A), lambda g: (0, 0)),               # fc2 b
        ],
        out_specs=pl.BlockSpec((BB, A), lambda g: (g, 0)),
        compiler_params=pltpu.CompilerParams(
            dimension_semantics=("parallel",)),
    )(patches, mask9, sel2, w1t, b1r, w2t, b2r, fw1_sc, fb1r, fw2t, fb2r)


# ---------------------------------------------------------------------------
# Deterministic parameter init (PyTorch weight shapes)
# ---------------------------------------------------------------------------
def init_params(key, input_shape, n_actions):
    H, W = input_shape
    conv_out = 32 * (H // 4) * (W // 4)
    ks = jax.random.split(key, 8)

    def make(k, shape, fan_in):
        return jax.random.normal(k, shape, jnp.float32) / jnp.sqrt(float(fan_in))

    w1 = make(ks[0], (16, 1, 3, 3), 9)
    b1 = make(ks[1], (16,), 9)
    w2 = make(ks[2], (32, 16, 3, 3), 16 * 9)
    b2 = make(ks[3], (32,), 16 * 9)
    fw1 = make(ks[4], (128, conv_out), conv_out)
    fb1 = make(ks[5], (128,), conv_out)
    fw2 = make(ks[6], (n_actions, 128), 128)
    fb2 = make(ks[7], (n_actions,), 128)
    return (w1, b1, w2, b2, fw1, fb1, fw2, fb2)


# ---------------------------------------------------------------------------
# Pure-JAX reference (correctness check)
# ---------------------------------------------------------------------------
def ref_forward(x_nchw, params):
    (w1, b1, w2, b2, fw1, fb1, fw2, fb2) = params
    dn = ("NCHW", "OIHW", "NCHW")
    y = jax.lax.conv_general_dilated(x_nchw, w1, (1, 1), "SAME",
                                     dimension_numbers=dn)
    y = jax.nn.relu(y + b1[None, :, None, None])
    y = jax.lax.reduce_window(y, -jnp.inf, jax.lax.max,
                              (1, 1, 2, 2), (1, 1, 2, 2), "VALID")
    y = jax.lax.conv_general_dilated(y, w2, (1, 1), "SAME",
                                     dimension_numbers=dn)
    y = jax.nn.relu(y + b2[None, :, None, None])
    y = jax.lax.reduce_window(y, -jnp.inf, jax.lax.max,
                              (1, 1, 2, 2), (1, 1, 2, 2), "VALID")
    y = y.reshape(x_nchw.shape[0], -1)
    y = jax.nn.relu(y @ fw1.T + fb1)
    return y @ fw2.T + fb2


if __name__ == "__main__":
    key = jax.random.PRNGKey(0)
    kx, kp = jax.random.split(key)

    input_shape = (16, 16)
    n_actions = 4
    batch = 2

    x = jax.random.normal(kx, (batch, 1, *input_shape), jnp.float32)
    params = init_params(kp, input_shape, n_actions)
    kparams = prepare_params(params)        # one-time re-layout, outside jit

    out = jax.block_until_ready(dqn_forward(x, kparams))
    ref = ref_forward(x, params)

    assert out.shape == (batch, n_actions), out.shape
    assert bool(jnp.all(jnp.isfinite(out)))
    # bf16 MXU operands (f32 accumulation) leave ~1e-2 abs error at these
    # activation magnitudes, hence the slightly relaxed tolerance vs pure f32.
    assert bool(jnp.allclose(out, ref, rtol=4e-2, atol=4e-2)), (out, ref)

    print("KERNEL_OK")
</pallas_src>

<mosaic_0001>
module attributes {stable_mosaic.version = 11 : i64} {
  func.func @_dqn_kernel(%arg0: i32, %arg1: memref<512x9xbf16, #tpu.memory_space<vmem>>, %arg2: memref<128x9xf32, #tpu.memory_space<vmem>>, %arg3: memref<32x128xf32, #tpu.memory_space<vmem>>, %arg4: memref<9x16xbf16, #tpu.memory_space<vmem>>, %arg5: memref<1x16xf32, #tpu.memory_space<vmem>>, %arg6: memref<144x32xbf16, #tpu.memory_space<vmem>>, %arg7: memref<1x32xf32, #tpu.memory_space<vmem>>, %arg8: memref<512x128xbf16, #tpu.memory_space<vmem>>, %arg9: memref<1x128xf32, #tpu.memory_space<vmem>>, %arg10: memref<128x4xbf16, #tpu.memory_space<vmem>>, %arg11: memref<1x4xf32, #tpu.memory_space<vmem>>, %arg12: memref<2x4xf32, #tpu.memory_space<vmem>>) attributes {dimension_semantics = [#tpu.dimension_semantics<parallel>], iteration_bounds = array<i64: 1>, scalar_prefetch = 0 : i64, scratch_operands = 0 : i64, tpu.core_type = #tpu.core_type<tc>, window_params = [{transform_indices = @transform_0, window_bounds = array<i64: 512, 9>}, {pipeline_mode = #tpu.pipeline_mode<synchronous>, transform_indices = @transform_1, window_bounds = array<i64: 128, 9>}, {pipeline_mode = #tpu.pipeline_mode<synchronous>, transform_indices = @transform_2, window_bounds = array<i64: 32, 128>}, {pipeline_mode = #tpu.pipeline_mode<synchronous>, transform_indices = @transform_3, window_bounds = array<i64: 9, 16>}, {pipeline_mode = #tpu.pipeline_mode<synchronous>, transform_indices = @transform_4, window_bounds = array<i64: 1, 16>}, {pipeline_mode = #tpu.pipeline_mode<synchronous>, transform_indices = @transform_5, window_bounds = array<i64: 144, 32>}, {pipeline_mode = #tpu.pipeline_mode<synchronous>, transform_indices = @transform_6, window_bounds = array<i64: 1, 32>}, {pipeline_mode = #tpu.pipeline_mode<synchronous>, transform_indices = @transform_7, window_bounds = array<i64: 512, 128>}, {pipeline_mode = #tpu.pipeline_mode<synchronous>, transform_indices = @transform_8, window_bounds = array<i64: 1, 128>}, {pipeline_mode = #tpu.pipeline_mode<synchronous>, transform_indices = @transform_9, window_bounds = array<i64: 128, 4>}, {pipeline_mode = #tpu.pipeline_mode<synchronous>, transform_indices = @transform_10, window_bounds = array<i64: 1, 4>}, {transform_indices = @transform_11, window_bounds = array<i64: 2, 4>}]} {
    %c0 = arith.constant 0 : index
    %c0_0 = arith.constant 0 : index
    %0 = vector.load %arg1[%c0, %c0_0] : memref<512x9xbf16, #tpu.memory_space<vmem>>, vector<512x9xbf16>
    %c0_1 = arith.constant 0 : index
    %c0_2 = arith.constant 0 : index
    %1 = vector.load %arg4[%c0_1, %c0_2] : memref<9x16xbf16, #tpu.memory_space<vmem>>, vector<9x16xbf16>
    %cst = arith.constant dense<0.000000e+00> : vector<512x16xf32>
    %2 = tpu.matmul %0, %1, %cst {dimension_numbers = #tpu.dot_dimension_numbers<[1], [0], [0], [1], [0, 0, 1, 1], [], []>} : vector<512x9xbf16>, vector<9x16xbf16>, vector<512x16xf32> -> vector<512x16xf32>
    %c0_3 = arith.constant 0 : index
    %c0_4 = arith.constant 0 : index
    %3 = vector.load %arg5[%c0_3, %c0_4] : memref<1x16xf32, #tpu.memory_space<vmem>>, vector<1x16xf32>
    %4 = vector.broadcast %3 : vector<1x16xf32> to vector<512x16xf32>
    %5 = arith.addf %2, %4 : vector<512x16xf32>
    %cst_5 = arith.constant 0.000000e+00 : f32
    %6 = vector.broadcast %cst_5 : f32 to vector<512x16xf32>
    %7 = arith.maximumf %5, %6 : vector<512x16xf32>
    %8 = vector.extract_strided_slice %7 {offsets = [0, 0], sizes = [128, 16], strides = [1, 1]} : vector<512x16xf32> to vector<128x16xf32>
    %9 = vector.extract_strided_slice %7 {offsets = [128, 0], sizes = [128, 16], strides = [1, 1]} : vector<512x16xf32> to vector<128x16xf32>
    %10 = arith.maximumf %8, %9 : vector<128x16xf32>
    %11 = vector.extract_strided_slice %7 {offsets = [256, 0], sizes = [128, 16], strides = [1, 1]} : vector<512x16xf32> to vector<128x16xf32>
    %12 = vector.extract_strided_slice %7 {offsets = [384, 0], sizes = [128, 16], strides = [1, 1]} : vector<512x16xf32> to vector<128x16xf32>
    %13 = arith.maximumf %11, %12 : vector<128x16xf32>
    %14 = arith.maximumf %10, %13 : vector<128x16xf32>
    %c0_6 = arith.constant 0 : index
    %c0_7 = arith.constant 0 : index
    %15 = vector.load %arg2[%c0_6, %c0_7] : memref<128x9xf32, #tpu.memory_space<vmem>>, vector<128x9xf32>
    %16 = vector.extract_strided_slice %14 {offsets = [119, 0], sizes = [9, 16], strides = [1, 1]} : vector<128x16xf32> to vector<9x16xf32>
    %17 = vector.extract_strided_slice %14 {offsets = [0, 0], sizes = [119, 16], strides = [1, 1]} : vector<128x16xf32> to vector<119x16xf32>
    %18 = tpu.concatenate %16, %17 in 0 : vector<9x16xf32>, vector<119x16xf32> -> vector<128x16xf32>
    %19 = vector.extract_strided_slice %15 {offsets = [0, 0], sizes = [128, 1], strides = [1, 1]} : vector<128x9xf32> to vector<128x1xf32>
    %20 = vector.broadcast %19 : vector<128x1xf32> to vector<128x16xf32>
    %21 = arith.mulf %18, %20 : vector<128x16xf32>
    %22 = vector.extract_strided_slice %14 {offsets = [120, 0], sizes = [8, 16], strides = [1, 1]} : vector<128x16xf32> to vector<8x16xf32>
    %23 = vector.extract_strided_slice %14 {offsets = [0, 0], sizes = [120, 16], strides = [1, 1]} : vector<128x16xf32> to vector<120x16xf32>
    %24 = tpu.concatenate %22, %23 in 0 : vector<8x16xf32>, vector<120x16xf32> -> vector<128x16xf32>
    %25 = vector.extract_strided_slice %15 {offsets = [0, 1], sizes = [128, 1], strides = [1, 1]} : vector<128x9xf32> to vector<128x1xf32>
    %26 = vector.broadcast %25 : vector<128x1xf32> to vector<128x16xf32>
    %27 = arith.mulf %24, %26 : vector<128x16xf32>
    %28 = vector.extract_strided_slice %14 {offsets = [121, 0], sizes = [7, 16], strides = [1, 1]} : vector<128x16xf32> to vector<7x16xf32>
    %29 = vector.extract_strided_slice %14 {offsets = [0, 0], sizes = [121, 16], strides = [1, 1]} : vector<128x16xf32> to vector<121x16xf32>
    %30 = tpu.concatenate %28, %29 in 0 : vector<7x16xf32>, vector<121x16xf32> -> vector<128x16xf32>
    %31 = vector.extract_strided_slice %15 {offsets = [0, 2], sizes = [128, 1], strides = [1, 1]} : vector<128x9xf32> to vector<128x1xf32>
    %32 = vector.broadcast %31 : vector<128x1xf32> to vector<128x16xf32>
    %33 = arith.mulf %30, %32 : vector<128x16xf32>
    %34 = vector.extract_strided_slice %14 {offsets = [127, 0], sizes = [1, 16], strides = [1, 1]} : vector<128x16xf32> to vector<1x16xf32>
    %35 = vector.extract_strided_slice %14 {offsets = [0, 0], sizes = [127, 16], strides = [1, 1]} : vector<128x16xf32> to vector<127x16xf32>
    %36 = tpu.concatenate %34, %35 in 0 : vector<1x16xf32>, vector<127x16xf32> -> vector<128x16xf32>
    %37 = vector.extract_strided_slice %15 {offsets = [0, 3], sizes = [128, 1], strides = [1, 1]} : vector<128x9xf32> to vector<128x1xf32>
    %38 = vector.broadcast %37 : vector<128x1xf32> to vector<128x16xf32>
    %39 = arith.mulf %36, %38 : vector<128x16xf32>
    %40 = vector.extract_strided_slice %14 {offsets = [1, 0], sizes = [127, 16], strides = [1, 1]} : vector<128x16xf32> to vector<127x16xf32>
    %41 = vector.extract_strided_slice %14 {offsets = [0, 0], sizes = [1, 16], strides = [1, 1]} : vector<128x16xf32> to vector<1x16xf32>
    %42 = tpu.concatenate %40, %41 in 0 : vector<127x16xf32>, vector<1x16xf32> -> vector<128x16xf32>
    %43 = vector.extract_strided_slice %15 {offsets = [0, 5], sizes = [128, 1], strides = [1, 1]} : vector<128x9xf32> to vector<128x1xf32>
    %44 = vector.broadcast %43 : vector<128x1xf32> to vector<128x16xf32>
    %45 = arith.mulf %42, %44 : vector<128x16xf32>
    %46 = vector.extract_strided_slice %14 {offsets = [7, 0], sizes = [121, 16], strides = [1, 1]} : vector<128x16xf32> to vector<121x16xf32>
    %47 = vector.extract_strided_slice %14 {offsets = [0, 0], sizes = [7, 16], strides = [1, 1]} : vector<128x16xf32> to vector<7x16xf32>
    %48 = tpu.concatenate %46, %47 in 0 : vector<121x16xf32>, vector<7x16xf32> -> vector<128x16xf32>
    %49 = vector.extract_strided_slice %15 {offsets = [0, 6], sizes = [128, 1], strides = [1, 1]} : vector<128x9xf32> to vector<128x1xf32>
    %50 = vector.broadcast %49 : vector<128x1xf32> to vector<128x16xf32>
    %51 = arith.mulf %48, %50 : vector<128x16xf32>
    %52 = vector.extract_strided_slice %14 {offsets = [8, 0], sizes = [120, 16], strides = [1, 1]} : vector<128x16xf32> to vector<120x16xf32>
    %53 = vector.extract_strided_slice %14 {offsets = [0, 0], sizes = [8, 16], strides = [1, 1]} : vector<128x16xf32> to vector<8x16xf32>
    %54 = tpu.concatenate %52, %53 in 0 : vector<120x16xf32>, vector<8x16xf32> -> vector<128x16xf32>
    %55 = vector.extract_strided_slice %15 {offsets = [0, 7], sizes = [128, 1], strides = [1, 1]} : vector<128x9xf32> to vector<128x1xf32>
    %56 = vector.broadcast %55 : vector<128x1xf32> to vector<128x16xf32>
    %57 = arith.mulf %54, %56 : vector<128x16xf32>
    %58 = vector.extract_strided_slice %14 {offsets = [9, 0], sizes = [119, 16], strides = [1, 1]} : vector<128x16xf32> to vector<119x16xf32>
    %59 = vector.extract_strided_slice %14 {offsets = [0, 0], sizes = [9, 16], strides = [1, 1]} : vector<128x16xf32> to vector<9x16xf32>
    %60 = tpu.concatenate %58, %59 in 0 : vector<119x16xf32>, vector<9x16xf32> -> vector<128x16xf32>
    %61 = vector.extract_strided_slice %15 {offsets = [0, 8], sizes = [128, 1], strides = [1, 1]} : vector<128x9xf32> to vector<128x1xf32>
    %62 = vector.broadcast %61 : vector<128x1xf32> to vector<128x16xf32>
    %63 = arith.mulf %60, %62 : vector<128x16xf32>
    %64 = tpu.concatenate %21, %27, %33, %39, %14, %45, %51, %57, %63 in 1 : vector<128x16xf32>, vector<128x16xf32>, vector<128x16xf32>, vector<128x16xf32>, vector<128x16xf32>, vector<128x16xf32>, vector<128x16xf32>, vector<128x16xf32>, vector<128x16xf32> -> vector<128x144xf32>
    %65 = arith.truncf %64 : vector<128x144xf32> to vector<128x144xbf16>
    %c0_8 = arith.constant 0 : index
    %c0_9 = arith.constant 0 : index
    %66 = vector.load %arg6[%c0_8, %c0_9] : memref<144x32xbf16, #tpu.memory_space<vmem>>, vector<144x32xbf16>
    %cst_10 = arith.constant dense<0.000000e+00> : vector<128x32xf32>
    %67 = tpu.matmul %65, %66, %cst_10 {dimension_numbers = #tpu.dot_dimension_numbers<[1], [0], [0], [1], [0, 0, 1, 1], [], []>} : vector<128x144xbf16>, vector<144x32xbf16>, vector<128x32xf32> -> vector<128x32xf32>
    %c0_11 = arith.constant 0 : index
    %c0_12 = arith.constant 0 : index
    %68 = vector.load %arg7[%c0_11, %c0_12] : memref<1x32xf32, #tpu.memory_space<vmem>>, vector<1x32xf32>
    %69 = vector.broadcast %68 : vector<1x32xf32> to vector<128x32xf32>
    %70 = arith.addf %67, %69 : vector<128x32xf32>
    %cst_13 = arith.constant 0.000000e+00 : f32
    %71 = vector.broadcast %cst_13 : f32 to vector<128x32xf32>
    %72 = arith.maximumf %70, %71 : vector<128x32xf32>
    %73 = vector.extract_strided_slice %72 {offsets = [8, 0], sizes = [120, 32], strides = [1, 1]} : vector<128x32xf32> to vector<120x32xf32>
    %74 = vector.extract_strided_slice %72 {offsets = [0, 0], sizes = [8, 32], strides = [1, 1]} : vector<128x32xf32> to vector<8x32xf32>
    %75 = tpu.concatenate %73, %74 in 0 : vector<120x32xf32>, vector<8x32xf32> -> vector<128x32xf32>
    %76 = arith.maximumf %72, %75 : vector<128x32xf32>
    %77 = vector.extract_strided_slice %76 {offsets = [1, 0], sizes = [127, 32], strides = [1, 1]} : vector<128x32xf32> to vector<127x32xf32>
    %78 = vector.extract_strided_slice %76 {offsets = [0, 0], sizes = [1, 32], strides = [1, 1]} : vector<128x32xf32> to vector<1x32xf32>
    %79 = tpu.concatenate %77, %78 in 0 : vector<127x32xf32>, vector<1x32xf32> -> vector<128x32xf32>
    %80 = arith.maximumf %76, %79 : vector<128x32xf32>
    %c0_14 = arith.constant 0 : index
    %c0_15 = arith.constant 0 : index
    %81 = vector.load %arg3[%c0_14, %c0_15] : memref<32x128xf32, #tpu.memory_space<vmem>>, vector<32x128xf32>
    %cst_16 = arith.constant dense<0.000000e+00> : vector<32x32xf32>
    %82 = tpu.matmul %81, %80, %cst_16 {dimension_numbers = #tpu.dot_dimension_numbers<[1], [0], [0], [1], [0, 0, 1, 1], [], []>} : vector<32x128xf32>, vector<128x32xf32>, vector<32x32xf32> -> vector<32x32xf32>
    %83 = vector.extract_strided_slice %82 {offsets = [0, 0], sizes = [2, 32], strides = [1, 1]} : vector<32x32xf32> to vector<2x32xf32>
    %84 = vector.extract_strided_slice %82 {offsets = [2, 0], sizes = [2, 32], strides = [1, 1]} : vector<32x32xf32> to vector<2x32xf32>
    %85 = vector.extract_strided_slice %82 {offsets = [4, 0], sizes = [2, 32], strides = [1, 1]} : vector<32x32xf32> to vector<2x32xf32>
    %86 = vector.extract_strided_slice %82 {offsets = [6, 0], sizes = [2, 32], strides = [1, 1]} : vector<32x32xf32> to vector<2x32xf32>
    %87 = vector.extract_strided_slice %82 {offsets = [8, 0], sizes = [2, 32], strides = [1, 1]} : vector<32x32xf32> to vector<2x32xf32>
    %88 = vector.extract_strided_slice %82 {offsets = [10, 0], sizes = [2, 32], strides = [1, 1]} : vector<32x32xf32> to vector<2x32xf32>
    %89 = vector.extract_strided_slice %82 {offsets = [12, 0], sizes = [2, 32], strides = [1, 1]} : vector<32x32xf32> to vector<2x32xf32>
    %90 = vector.extract_strided_slice %82 {offsets = [14, 0], sizes = [2, 32], strides = [1, 1]} : vector<32x32xf32> to vector<2x32xf32>
    %91 = vector.extract_strided_slice %82 {offsets = [16, 0], sizes = [2, 32], strides = [1, 1]} : vector<32x32xf32> to vector<2x32xf32>
    %92 = vector.extract_strided_slice %82 {offsets = [18, 0], sizes = [2, 32], strides = [1, 1]} : vector<32x32xf32> to vector<2x32xf32>
    %93 = vector.extract_strided_slice %82 {offsets = [20, 0], sizes = [2, 32], strides = [1, 1]} : vector<32x32xf32> to vector<2x32xf32>
    %94 = vector.extract_strided_slice %82 {offsets = [22, 0], sizes = [2, 32], strides = [1, 1]} : vector<32x32xf32> to vector<2x32xf32>
    %95 = vector.extract_strided_slice %82 {offsets = [24, 0], sizes = [2, 32], strides = [1, 1]} : vector<32x32xf32> to vector<2x32xf32>
    %96 = vector.extract_strided_slice %82 {offsets = [26, 0], sizes = [2, 32], strides = [1, 1]} : vector<32x32xf32> to vector<2x32xf32>
    %97 = vector.extract_strided_slice %82 {offsets = [28, 0], sizes = [2, 32], strides = [1, 1]} : vector<32x32xf32> to vector<2x32xf32>
    %98 = vector.extract_strided_slice %82 {offsets = [30, 0], sizes = [2, 32], strides = [1, 1]} : vector<32x32xf32> to vector<2x32xf32>
    %99 = tpu.concatenate %83, %84, %85, %86, %87, %88, %89, %90, %91, %92, %93, %94, %95, %96, %97, %98 in 1 : vector<2x32xf32>, vector<2x32xf32>, vector<2x32xf32>, vector<2x32xf32>, vector<2x32xf32>, vector<2x32xf32>, vector<2x32xf32>, vector<2x32xf32>, vector<2x32xf32>, vector<2x32xf32>, vector<2x32xf32>, vector<2x32xf32>, vector<2x32xf32>, vector<2x32xf32>, vector<2x32xf32>, vector<2x32xf32> -> vector<2x512xf32>
    %100 = arith.truncf %99 : vector<2x512xf32> to vector<2x512xbf16>
    %c0_17 = arith.constant 0 : index
    %c0_18 = arith.constant 0 : index
    %101 = vector.load %arg8[%c0_17, %c0_18] : memref<512x128xbf16, #tpu.memory_space<vmem>>, vector<512x128xbf16>
    %cst_19 = arith.constant dense<0.000000e+00> : vector<2x128xf32>
    %102 = tpu.matmul %100, %101, %cst_19 {dimension_numbers = #tpu.dot_dimension_numbers<[1], [0], [0], [1], [0, 0, 1, 1], [], []>} : vector<2x512xbf16>, vector<512x128xbf16>, vector<2x128xf32> -> vector<2x128xf32>
    %c0_20 = arith.constant 0 : index
    %c0_21 = arith.constant 0 : index
    %103 = vector.load %arg9[%c0_20, %c0_21] : memref<1x128xf32, #tpu.memory_space<vmem>>, vector<1x128xf32>
    %104 = vector.broadcast %103 : vector<1x128xf32> to vector<2x128xf32>
    %105 = arith.addf %102, %104 : vector<2x128xf32>
    %cst_22 = arith.constant 0.000000e+00 : f32
    %106 = vector.broadcast %cst_22 : f32 to vector<2x128xf32>
    %107 = arith.maximumf %105, %106 : vector<2x128xf32>
    %108 = arith.truncf %107 : vector<2x128xf32> to vector<2x128xbf16>
    %c0_23 = arith.constant 0 : index
    %c0_24 = arith.constant 0 : index
    %109 = vector.load %arg10[%c0_23, %c0_24] : memref<128x4xbf16, #tpu.memory_space<vmem>>, vector<128x4xbf16>
    %cst_25 = arith.constant dense<0.000000e+00> : vector<2x4xf32>
    %110 = tpu.matmul %108, %109, %cst_25 {dimension_numbers = #tpu.dot_dimension_numbers<[1], [0], [0], [1], [0, 0, 1, 1], [], []>} : vector<2x128xbf16>, vector<128x4xbf16>, vector<2x4xf32> -> vector<2x4xf32>
    %c0_26 = arith.constant 0 : index
    %c0_27 = arith.constant 0 : index
    %111 = vector.load %arg11[%c0_26, %c0_27] : memref<1x4xf32, #tpu.memory_space<vmem>>, vector<1x4xf32>
    %112 = vector.broadcast %111 : vector<1x4xf32> to vector<2x4xf32>
    %113 = arith.addf %110, %112 : vector<2x4xf32>
    %c0_28 = arith.constant 0 : index
    %c0_29 = arith.constant 0 : index
    %114 = vector.load %arg12[%c0_28, %c0_29] : memref<2x4xf32, #tpu.memory_space<vmem>>, vector<2x4xf32>
    tpu.vector_store %arg12[%c0_28, %c0_29], %113 {strides = array<i32>} : memref<2x4xf32, #tpu.memory_space<vmem>>, vector<2x4xf32>,
    return
  }
  func.func @transform_0(%arg0: i32) -> (i32, i32) {
    %c0_i32 = arith.constant 0 : i32
    %c0_i32_0 = arith.constant 0 : i32
    return %arg0, %c0_i32 : i32, i32
  }
  func.func @transform_1(%arg0: i32) -> (i32, i32) {
    %c0_i32 = arith.constant 0 : i32
    %c0_i32_0 = arith.constant 0 : i32
    %c0_i32_1 = arith.constant 0 : i32
    return %c0_i32, %c0_i32_0 : i32, i32
  }
  func.func @transform_2(%arg0: i32) -> (i32, i32) {
    %c0_i32 = arith.constant 0 : i32
    %c0_i32_0 = arith.constant 0 : i32
    %c0_i32_1 = arith.constant 0 : i32
    return %c0_i32, %c0_i32_0 : i32, i32
  }
  func.func @transform_3(%arg0: i32) -> (i32, i32) {
    %c0_i32 = arith.constant 0 : i32
    %c0_i32_0 = arith.constant 0 : i32
    %c0_i32_1 = arith.constant 0 : i32
    return %c0_i32, %c0_i32_0 : i32, i32
  }
  func.func @transform_4(%arg0: i32) -> (i32, i32) {
    %c0_i32 = arith.constant 0 : i32
    %c0_i32_0 = arith.constant 0 : i32
    %c0_i32_1 = arith.constant 0 : i32
    return %c0_i32, %c0_i32_0 : i32, i32
  }
  func.func @transform_5(%arg0: i32) -> (i32, i32) {
    %c0_i32 = arith.constant 0 : i32
    %c0_i32_0 = arith.constant 0 : i32
    %c0_i32_1 = arith.constant 0 : i32
    return %c0_i32, %c0_i32_0 : i32, i32
  }
  func.func @transform_6(%arg0: i32) -> (i32, i32) {
    %c0_i32 = arith.constant 0 : i32
    %c0_i32_0 = arith.constant 0 : i32
    %c0_i32_1 = arith.constant 0 : i32
    return %c0_i32, %c0_i32_0 : i32, i32
  }
  func.func @transform_7(%arg0: i32) -> (i32, i32) {
    %c0_i32 = arith.constant 0 : i32
    %c0_i32_0 = arith.constant 0 : i32
    %c0_i32_1 = arith.constant 0 : i32
    return %c0_i32, %c0_i32_0 : i32, i32
  }
  func.func @transform_8(%arg0: i32) -> (i32, i32) {
    %c0_i32 = arith.constant 0 : i32
    %c0_i32_0 = arith.constant 0 : i32
    %c0_i32_1 = arith.constant 0 : i32
    return %c0_i32, %c0_i32_0 : i32, i32
  }
  func.func @transform_9(%arg0: i32) -> (i32, i32) {
    %c0_i32 = arith.constant 0 : i32
    %c0_i32_0 = arith.constant 0 : i32
    %c0_i32_1 = arith.constant 0 : i32
    return %c0_i32, %c0_i32_0 : i32, i32
  }
  func.func @transform_10(%arg0: i32) -> (i32, i32) {
    %c0_i32 = arith.constant 0 : i32
    %c0_i32_0 = arith.constant 0 : i32
    %c0_i32_1 = arith.constant 0 : i32
    return %c0_i32, %c0_i32_0 : i32, i32
  }
  func.func @transform_11(%arg0: i32) -> (i32, i32) {
    %c0_i32 = arith.constant 0 : i32
    %c0_i32_0 = arith.constant 0 : i32
    return %arg0, %c0_i32 : i32, i32
  }
}

</mosaic_0001>

<llo_original>
// kernel: dqn_forward.1
$region0: #{dqn_forward.1}
  #allocation0 [shape = 'u32[]', space=smem, size = 0x4, offset = 0x4, fixed_abs, tag = 'smem constant byte address 0x4 - core index']
  #allocation1 [shape = 'u32[144,128]{1,0:T(1,128)}', space=vmem, size = 0x12000, scoped, tag = 'internal scratch']
  %s0 = inlined_call_operand.vmem [shape: bf16[512,9], index: 0, kind: input, shape index: {}]
  %s1 = inlined_call_operand.vmem [shape: f32[128,9], index: 1, kind: input, shape index: {}]
  %s2 = inlined_call_operand.vmem [shape: f32[32,128], index: 2, kind: input, shape index: {}]
  %s3 = inlined_call_operand.vmem [shape: bf16[9,16], index: 3, kind: input, shape index: {}]
  %s4 = inlined_call_operand.vmem [shape: f32[1,16], index: 4, kind: input, shape index: {}]
  %s5 = inlined_call_operand.vmem [shape: bf16[144,32], index: 5, kind: input, shape index: {}]
  %s6 = inlined_call_operand.vmem [shape: f32[1,32], index: 6, kind: input, shape index: {}]
  %s7 = inlined_call_operand.vmem [shape: bf16[512,128], index: 7, kind: input, shape index: {}]
  %s8 = inlined_call_operand.vmem [shape: f32[1,128], index: 8, kind: input, shape index: {}]
  %s9 = inlined_call_operand.vmem [shape: bf16[128,4], index: 9, kind: input, shape index: {}]
  %s10 = inlined_call_operand.vmem [shape: f32[1,4], index: 10, kind: input, shape index: {}]
  %s11 = inlined_call_operand.hbm [shape: f32[2,4], index: 11, kind: output, shape index: {}]
  %s12 = sld [smem:[#allocation0]]
  $region54: #{dqn_forward.1} parent=0
    _
  %s14 = ssub.s32 1, %s12
  %s15 = scalar_select 0, %s14, %s12
  $region1: #{dqn_forward.1} parent=0
    #allocation2 [shape = 'u8[1024]{0}', space=vmem, size = 0x400, scoped, tag = 'output window, operand 0, single buffered']
    #allocation3 [shape = 's32[1]{0}', space=sflag, size = 0x4, scoped, tag = 'scoped memory for dqn_forward.1']
    %16 = vsyncpa [#allocation3], 0
    // Predicated region
    $region2: #{dqn_forward.1} parent=1 // pred_check
      _
    $region3: #{dqn_forward.1} parent=1 // pred_check_branch
      %18 = sbr.rel (0) target = $region5
    $region4: #{dqn_forward.1} parent=1 // pred_region
      _
    $region5: #{dqn_forward.1} parent=1 // pred_fallthru
      _
    // Predicated region
    $region6: #{dqn_forward.1} parent=1 // pred_check
      _
    $region7: #{dqn_forward.1} parent=1 // pred_check_branch
      %20 = sbr.rel (0) target = $region9
    $region8: #{dqn_forward.1} parent=1 // pred_region
      _
    $region9: #{dqn_forward.1} parent=1 // pred_fallthru
      _
    // Predicated region
    $region10: #{dqn_forward.1} parent=1 // pred_check
      _
    $region11: #{dqn_forward.1} parent=1 // pred_check_branch
      %22 = sbr.rel (0) target = $region13
    $region12: #{dqn_forward.1} parent=1 // pred_region
      _
    $region13: #{dqn_forward.1} parent=1 // pred_fallthru
      _
    // Predicated region
    $region14: #{dqn_forward.1} parent=1 // pred_check
      _
    $region15: #{dqn_forward.1} parent=1 // pred_check_branch
      %24 = sbr.rel (0) target = $region17
    $region16: #{dqn_forward.1} parent=1 // pred_region
      _
    $region17: #{dqn_forward.1} parent=1 // pred_fallthru
      _
    // Predicated region
    $region18: #{dqn_forward.1} parent=1 // pred_check
      _
    $region19: #{dqn_forward.1} parent=1 // pred_check_branch
      %26 = sbr.rel (0) target = $region21
    $region20: #{dqn_forward.1} parent=1 // pred_region
      _
    $region21: #{dqn_forward.1} parent=1 // pred_fallthru
      _
    // Predicated region
    $region22: #{dqn_forward.1} parent=1 // pred_check
      _
    $region23: #{dqn_forward.1} parent=1 // pred_check_branch
      %28 = sbr.rel (0) target = $region25
    $region24: #{dqn_forward.1} parent=1 // pred_region
      _
    $region25: #{dqn_forward.1} parent=1 // pred_fallthru
      _
    // Predicated region
    $region26: #{dqn_forward.1} parent=1 // pred_check
      _
    $region27: #{dqn_forward.1} parent=1 // pred_check_branch
      %30 = sbr.rel (0) target = $region29
    $region28: #{dqn_forward.1} parent=1 // pred_region
      _
    $region29: #{dqn_forward.1} parent=1 // pred_fallthru
      _
    // Predicated region
    $region30: #{dqn_forward.1} parent=1 // pred_check
      _
    $region31: #{dqn_forward.1} parent=1 // pred_check_branch
      %32 = sbr.rel (0) target = $region33
    $region32: #{dqn_forward.1} parent=1 // pred_region
      _
    $region33: #{dqn_forward.1} parent=1 // pred_fallthru
      _
    // Predicated region
    $region34: #{dqn_forward.1} parent=1 // pred_check
      _
    $region35: #{dqn_forward.1} parent=1 // pred_check_branch
      %34 = sbr.rel (0) target = $region37
    $region36: #{dqn_forward.1} parent=1 // pred_region
      _
    $region37: #{dqn_forward.1} parent=1 // pred_fallthru
      _
    // Predicated region
    $region38: #{dqn_forward.1} parent=1 // pred_check
      _
    $region39: #{dqn_forward.1} parent=1 // pred_check_branch
      %36 = sbr.rel (0) target = $region41
    $region40: #{dqn_forward.1} parent=1 // pred_region
      _
    $region41: #{dqn_forward.1} parent=1 // pred_fallthru
      _
    // Predicated region
    $region42: #{dqn_forward.1} parent=1 // pred_check
      _
    $region43: #{dqn_forward.1} parent=1 // pred_check_branch
      %38 = sbr.rel (0) target = $region45
    $region44: #{dqn_forward.1} parent=1 // pred_region
      _
    $region45: #{dqn_forward.1} parent=1 // pred_fallthru
      _
    %v40 = vld [vmem:[%s0] sm:$0xf]
    %v41 = vld [vmem:[%s0 + $0x4] sm:$0xf]
    %v42 = vld [vmem:[%s0 + $0x8] sm:$0xf]
    %v43 = vld [vmem:[%s0 + $0xc] sm:$0xf]
    %v44 = vld [vmem:[%s0 + $0x10] sm:$0xf]
    %v45 = vld [vmem:[%s0 + $0x14] sm:$0xf]
    %v46 = vld [vmem:[%s0 + $0x18] sm:$0xf]
    %v47 = vld [vmem:[%s0 + $0x1c] sm:$0xf]
    %v48 = vld [vmem:[%s0 + $0x20] sm:$0xf]
    %v49 = vld [vmem:[%s0 + $0x24] sm:$0xf]
    %v50 = vld [vmem:[%s0 + $0x28] sm:$0xf]
    %v51 = vld [vmem:[%s0 + $0x2c] sm:$0xf]
    %v52 = vld [vmem:[%s0 + $0x30] sm:$0xf]
    %v53 = vld [vmem:[%s0 + $0x34] sm:$0xf]
    %v54 = vld [vmem:[%s0 + $0x38] sm:$0xf]
    %v55 = vld [vmem:[%s0 + $0x3c] sm:$0xf]
    %v56 = vld [vmem:[%s0 + $0x40] sm:$0xf]
    %v57 = vld [vmem:[%s0 + $0x44] sm:$0xf]
    %v58 = vld [vmem:[%s0 + $0x48] sm:$0xf]
    %v59 = vld [vmem:[%s0 + $0x4c] sm:$0xf]
    %v60 = vld [vmem:[%s0 + $0x50] sm:$0xf]
    %v61 = vld [vmem:[%s0 + $0x54] sm:$0xf]
    %v62 = vld [vmem:[%s0 + $0x58] sm:$0xf]
    %v63 = vld [vmem:[%s0 + $0x5c] sm:$0xf]
    %v64 = vld [vmem:[%s0 + $0x60] sm:$0xf]
    %v65 = vld [vmem:[%s0 + $0x64] sm:$0xf]
    %v66 = vld [vmem:[%s0 + $0x68] sm:$0xf]
    %v67 = vld [vmem:[%s0 + $0x6c] sm:$0xf]
    %v68 = vld [vmem:[%s0 + $0x70] sm:$0xf]
    %v69 = vld [vmem:[%s0 + $0x74] sm:$0xf]
    %v70 = vld [vmem:[%s0 + $0x78] sm:$0xf]
    %v71 = vld [vmem:[%s0 + $0x7c] sm:$0xf]
    %v72 = vld [vmem:[%s0 + $0x80] sm:$0xf]
    %v73 = vld [vmem:[%s0 + $0x84] sm:$0xf]
    %v74 = vld [vmem:[%s0 + $0x88] sm:$0xf]
    %v75 = vld [vmem:[%s0 + $0x8c] sm:$0xf]
    %v76 = vld [vmem:[%s0 + $0x90] sm:$0xf]
    %v77 = vld [vmem:[%s0 + $0x94] sm:$0xf]
    %v78 = vld [vmem:[%s0 + $0x98] sm:$0xf]
    %v79 = vld [vmem:[%s0 + $0x9c] sm:$0xf]
    %v80 = vld [vmem:[%s0 + $0xa0] sm:$0xf]
    %v81 = vld [vmem:[%s0 + $0xa4] sm:$0xf]
    %v82 = vld [vmem:[%s0 + $0xa8] sm:$0xf]
    %v83 = vld [vmem:[%s0 + $0xac] sm:$0xf]
    %v84 = vld [vmem:[%s0 + $0xb0] sm:$0xf]
    %v85 = vld [vmem:[%s0 + $0xb4] sm:$0xf]
    %v86 = vld [vmem:[%s0 + $0xb8] sm:$0xf]
    %v87 = vld [vmem:[%s0 + $0xbc] sm:$0xf]
    %v88 = vld [vmem:[%s0 + $0xc0] sm:$0xf]
    %v89 = vld [vmem:[%s0 + $0xc4] sm:$0xf]
    %v90 = vld [vmem:[%s0 + $0xc8] sm:$0xf]
    %v91 = vld [vmem:[%s0 + $0xcc] sm:$0xf]
    %v92 = vld [vmem:[%s0 + $0xd0] sm:$0xf]
    %v93 = vld [vmem:[%s0 + $0xd4] sm:$0xf]
    %v94 = vld [vmem:[%s0 + $0xd8] sm:$0xf]
    %v95 = vld [vmem:[%s0 + $0xdc] sm:$0xf]
    %v96 = vld [vmem:[%s0 + $0xe0] sm:$0xf]
    %v97 = vld [vmem:[%s0 + $0xe4] sm:$0xf]
    %v98 = vld [vmem:[%s0 + $0xe8] sm:$0xf]
    %v99 = vld [vmem:[%s0 + $0xec] sm:$0xf]
    %v100 = vld [vmem:[%s0 + $0xf0] sm:$0xf]
    %v101 = vld [vmem:[%s0 + $0xf4] sm:$0xf]
    %v102 = vld [vmem:[%s0 + $0xf8] sm:$0xf]
    %v103 = vld [vmem:[%s0 + $0xfc] sm:$0xf]
    %v104 = vld [vmem:[%s3] sm:$0xf]
    %v105 = vld [vmem:[%s3 + $0x4] sm:$0x1]
    %v106 = vld [vmem:[%s4] sm:$0x1]
    %v108 = vlaneseq
    %v109 = vshrl.u32 %v108, 7
    %v110 = vsub.s32 0, %v109
    %v111 = vrot.slane %v106, %v110
    %v177 = vunpack.c.l.b16 %v40
    %v178 = vunpack.c.l.b16 %v41
    %v179 = vunpack.c.l.b16 %v42
    %v180 = vunpack.c.l.b16 %v43
    %v181 = vunpack.c.l.b16 %v44
    %v182 = vunpack.c.l.b16 %v45
    %v183 = vunpack.c.l.b16 %v46
    %v184 = vunpack.c.l.b16 %v47
    %v185 = vunpack.c.l.b16 %v48
    %v186 = vunpack.c.l.b16 %v49
    %v187 = vunpack.c.l.b16 %v50
    %v188 = vunpack.c.l.b16 %v51
    %v189 = vunpack.c.l.b16 %v52
    %v190 = vunpack.c.l.b16 %v53
    %v191 = vunpack.c.l.b16 %v54
    %v192 = vunpack.c.l.b16 %v55
    %v193 = vunpack.c.l.b16 %v56
    %v194 = vunpack.c.l.b16 %v57
    %v195 = vunpack.c.l.b16 %v58
    %v196 = vunpack.c.l.b16 %v59
    %v197 = vunpack.c.l.b16 %v60
    %v198 = vunpack.c.l.b16 %v61
    %v199 = vunpack.c.l.b16 %v62
    %v200 = vunpack.c.l.b16 %v63
    %v201 = vunpack.c.l.b16 %v64
    %v202 = vunpack.c.l.b16 %v65
    %v203 = vunpack.c.l.b16 %v66
    %v204 = vunpack.c.l.b16 %v67
    %v205 = vunpack.c.l.b16 %v68
    %v206 = vunpack.c.l.b16 %v69
    %v207 = vunpack.c.l.b16 %v70
    %v208 = vunpack.c.l.b16 %v71
    %v209 = vunpack.c.l.b16 %v72
    %v210 = vunpack.c.l.b16 %v73
    %v211 = vunpack.c.l.b16 %v74
    %v212 = vunpack.c.l.b16 %v75
    %v213 = vunpack.c.l.b16 %v76
    %v214 = vunpack.c.l.b16 %v77
    %v215 = vunpack.c.l.b16 %v78
    %v216 = vunpack.c.l.b16 %v79
    %v217 = vunpack.c.l.b16 %v80
    %v218 = vunpack.c.l.b16 %v81
    %v219 = vunpack.c.l.b16 %v82
    %v220 = vunpack.c.l.b16 %v83
    %v221 = vunpack.c.l.b16 %v84
    %v222 = vunpack.c.l.b16 %v85
    %v223 = vunpack.c.l.b16 %v86
    %v224 = vunpack.c.l.b16 %v87
    %v225 = vunpack.c.l.b16 %v88
    %v226 = vunpack.c.l.b16 %v89
    %v227 = vunpack.c.l.b16 %v90
    %v228 = vunpack.c.l.b16 %v91
    %v229 = vunpack.c.l.b16 %v92
    %v230 = vunpack.c.l.b16 %v93
    %v231 = vunpack.c.l.b16 %v94
    %v232 = vunpack.c.l.b16 %v95
    %v233 = vunpack.c.l.b16 %v96
    %v234 = vunpack.c.l.b16 %v97
    %v235 = vunpack.c.l.b16 %v98
    %v236 = vunpack.c.l.b16 %v99
    %v237 = vunpack.c.l.b16 %v100
    %v238 = vunpack.c.l.b16 %v101
    %v239 = vunpack.c.l.b16 %v102
    %v240 = vunpack.c.l.b16 %v103
    %v241 = vpack.c.b16 %v178, %v177
    %v242 = vpack.c.b16 %v180, %v179
    %v243 = vpack.c.b16 %v182, %v181
    %v244 = vpack.c.b16 %v184, %v183
    %v245 = vpack.c.b16 %v186, %v185
    %v246 = vpack.c.b16 %v188, %v187
    %v247 = vpack.c.b16 %v190, %v189
    %v248 = vpack.c.b16 %v192, %v191
    %v249 = vpack.c.b16 %v194, %v193
    %v250 = vpack.c.b16 %v196, %v195
    %v251 = vpack.c.b16 %v198, %v197
    %v252 = vpack.c.b16 %v200, %v199
    %v253 = vpack.c.b16 %v202, %v201
    %v254 = vpack.c.b16 %v204, %v203
    %v255 = vpack.c.b16 %v206, %v205
    %v256 = vpack.c.b16 %v208, %v207
    %v257 = vpack.c.b16 %v210, %v209
    %v258 = vpack.c.b16 %v212, %v211
    %v259 = vpack.c.b16 %v214, %v213
    %v260 = vpack.c.b16 %v216, %v215
    %v261 = vpack.c.b16 %v218, %v217
    %v262 = vpack.c.b16 %v220, %v219
    %v263 = vpack.c.b16 %v222, %v221
    %v264 = vpack.c.b16 %v224, %v223
    %v265 = vpack.c.b16 %v226, %v225
    %v266 = vpack.c.b16 %v228, %v227
    %v267 = vpack.c.b16 %v230, %v229
    %v268 = vpack.c.b16 %v232, %v231
    %v269 = vpack.c.b16 %v234, %v233
    %v270 = vpack.c.b16 %v236, %v235
    %v271 = vpack.c.b16 %v238, %v237
    %v272 = vpack.c.b16 %v240, %v239
    %v275 = vunpack.c.l.b16 %v104
    %v276 = vunpack.c.l.b16 %v105
    %v277 = vpack.c.b16 %v276, %v275
    %vm278 = vcmask 72704
    %v280 = vsel %vm278, %v241, 0
    %v283 = vsel %vm278, %v242, 0
    %v286 = vsel %vm278, %v243, 0
    %v289 = vsel %vm278, %v244, 0
    %v292 = vsel %vm278, %v245, 0
    %v295 = vsel %vm278, %v246, 0
    %v298 = vsel %vm278, %v247, 0
    %v301 = vsel %vm278, %v248, 0
    %v304 = vsel %vm278, %v249, 0
    %v307 = vsel %vm278, %v250, 0
    %v310 = vsel %vm278, %v251, 0
    %v313 = vsel %vm278, %v252, 0
    %v316 = vsel %vm278, %v253, 0
    %v319 = vsel %vm278, %v254, 0
    %v322 = vsel %vm278, %v255, 0
    %v325 = vsel %vm278, %v256, 0
    %v328 = vsel %vm278, %v257, 0
    %v331 = vsel %vm278, %v258, 0
    %v334 = vsel %vm278, %v259, 0
    %v337 = vsel %vm278, %v260, 0
    %v340 = vsel %vm278, %v261, 0
    %v343 = vsel %vm278, %v262, 0
    %v346 = vsel %vm278, %v263, 0
    %v349 = vsel %vm278, %v264, 0
    %v352 = vsel %vm278, %v265, 0
    %v355 = vsel %vm278, %v266, 0
    %v358 = vsel %vm278, %v267, 0
    %v361 = vsel %vm278, %v268, 0
    %v364 = vsel %vm278, %v269, 0
    %v367 = vsel %vm278, %v270, 0
    %v370 = vsel %vm278, %v271, 0
    %v373 = vsel %vm278, %v272, 0
    %vm375 = vcmask 1043456
    %vm376 = vcmask 1044480
    %v377 = vsel %vm375, 4294967295, 65535
    %v378 = vsel %vm376, %v377, 0
    %v380 = vand.u32 %v277, %v378
    %382 = vmatprep.subr.bf16.mxu0 0
    %383 = vmatpush1.bf16.msra.mxu0 %v380
    %384 = vmatprep.subr.bf16.mxu0 0
    %385 = vmatpush1.bf16.msra.mxu0 0
    %386 = vmatprep.subr.bf16.mxu0 0
    %387 = vmatpush1.bf16.msra.mxu0 0
    %388 = vmatprep.subr.bf16.mxu0 0
    %389 = vmatpush1.bf16.msra.mxu0 0
    %390 = vmatprep.subr.bf16.mxu0 0
    %391 = vmatpush1.bf16.msra.mxu0 0
    %392 = vmatprep.subr.bf16.mxu0 0
    %393 = vmatpush1.bf16.msra.mxu0 0
    %394 = vmatprep.subr.bf16.mxu0 0
    %395 = vmatpush1.bf16.msra.mxu0 0
    %396 = vmatprep.subr.bf16.mxu0 0
    %397 = vmatpush1.bf16.msra.mxu0 0
    %398 = vmatprep.subr.bf16.mxu0 0
    %399 = vmatpush1.bf16.msra.mxu0 0
    %400 = vmatprep.subr.bf16.mxu0 0
    %401 = vmatpush1.bf16.msra.mxu0 0
    %402 = vmatprep.subr.bf16.mxu0 0
    %403 = vmatpush1.bf16.msra.mxu0 0
    %404 = vmatprep.subr.bf16.mxu0 0
    %405 = vmatpush1.bf16.msra.mxu0 0
    %406 = vmatprep.subr.bf16.mxu0 0
    %407 = vmatpush1.bf16.msra.mxu0 0
    %408 = vmatprep.subr.bf16.mxu0 0
    %409 = vmatpush1.bf16.msra.mxu0 0
    %410 = vmatprep.subr.bf16.mxu0 0
    %411 = vmatpush1.bf16.msra.mxu0 0
    %412 = vmatprep.subr.bf16.mxu0 0
    %413 = vmatpush1.bf16.msra.mxu0 0
    %414 = vmatprep.mubr.bf16.mxu0 0
    %415 = vmatmul.mubr.bf16.gmra.mrb[0].mxu0 %v280
    %v416 = vpop.f32.mrb[0].mxu0
    %v417 = vadd.f32 %v111, %v416
    %v418 = vpop.f32.mrb[0].mxu0
    %v419 = vpop.f32.mrb[0].mxu0
    %v420 = vadd.f32 %v111, %v419
    %v421 = vpop.f32.mrb[0].mxu0
    %422 = vmatprep.mubr.bf16.mxu0 0
    %423 = vmatmul.mubr.bf16.gmra.mrb[0].mxu0 %v283
    %v424 = vpop.f32.mrb[0].mxu0
    %v425 = vadd.f32 %v111, %v424
    %v426 = vpop.f32.mrb[0].mxu0
    %v427 = vpop.f32.mrb[0].mxu0
    %v428 = vadd.f32 %v111, %v427
    %v429 = vpop.f32.mrb[0].mxu0
    %430 = vmatprep.mubr.bf16.mxu0 0
    %431 = vmatmul.mubr.bf16.gmra.mrb[0].mxu0 %v286
    %v432 = vpop.f32.mrb[0].mxu0
    %v433 = vadd.f32 %v111, %v432
    %v434 = vpop.f32.mrb[0].mxu0
    %v435 = vpop.f32.mrb[0].mxu0
    %v436 = vadd.f32 %v111, %v435
    %v437 = vpop.f32.mrb[0].mxu0
    %438 = vmatprep.mubr.bf16.mxu0 0
    %439 = vmatmul.mubr.bf16.gmra.mrb[0].mxu0 %v289
    %v440 = vpop.f32.mrb[0].mxu0
    %v441 = vadd.f32 %v111, %v440
    %v442 = vpop.f32.mrb[0].mxu0
    %v443 = vpop.f32.mrb[0].mxu0
    %v444 = vadd.f32 %v111, %v443
    %v445 = vpop.f32.mrb[0].mxu0
    %446 = vmatprep.mubr.bf16.mxu0 0
    %447 = vmatmul.mubr.bf16.gmra.mrb[0].mxu0 %v292
    %v448 = vpop.f32.mrb[0].mxu0
    %v449 = vadd.f32 %v111, %v448
    %v450 = vpop.f32.mrb[0].mxu0
    %v451 = vpop.f32.mrb[0].mxu0
    %v452 = vadd.f32 %v111, %v451
    %v453 = vpop.f32.mrb[0].mxu0
    %454 = vmatprep.mubr.bf16.mxu0 0
    %455 = vmatmul.mubr.bf16.gmra.mrb[0].mxu0 %v295
    %v456 = vpop.f32.mrb[0].mxu0
    %v457 = vadd.f32 %v111, %v456
    %v458 = vpop.f32.mrb[0].mxu0
    %v459 = vpop.f32.mrb[0].mxu0
    %v460 = vadd.f32 %v111, %v459
    %v461 = vpop.f32.mrb[0].mxu0
    %462 = vmatprep.mubr.bf16.mxu0 0
    %463 = vmatmul.mubr.bf16.gmra.mrb[0].mxu0 %v298
    %v464 = vpop.f32.mrb[0].mxu0
    %v465 = vadd.f32 %v111, %v464
    %v466 = vpop.f32.mrb[0].mxu0
    %v467 = vpop.f32.mrb[0].mxu0
    %v468 = vadd.f32 %v111, %v467
    %v469 = vpop.f32.mrb[0].mxu0
    %470 = vmatprep.mubr.bf16.mxu0 0
    %471 = vmatmul.mubr.bf16.gmra.mrb[0].mxu0 %v301
    %v472 = vpop.f32.mrb[0].mxu0
    %v473 = vadd.f32 %v111, %v472
    %v474 = vpop.f32.mrb[0].mxu0
    %v475 = vpop.f32.mrb[0].mxu0
    %v476 = vadd.f32 %v111, %v475
    %v477 = vpop.f32.mrb[0].mxu0
    %478 = vmatprep.mubr.bf16.mxu0 0
    %479 = vmatmul.mubr.bf16.gmra.mrb[0].mxu0 %v304
    %v480 = vpop.f32.mrb[0].mxu0
    %v481 = vadd.f32 %v111, %v480
    %v482 = vpop.f32.mrb[0].mxu0
    %v483 = vpop.f32.mrb[0].mxu0
    %v484 = vadd.f32 %v111, %v483
    %v485 = vpop.f32.mrb[0].mxu0
    %486 = vmatprep.mubr.bf16.mxu0 0
    %487 = vmatmul.mubr.bf16.gmra.mrb[0].mxu0 %v307
    %v488 = vpop.f32.mrb[0].mxu0
    %v489 = vadd.f32 %v111, %v488
    %v490 = vpop.f32.mrb[0].mxu0
    %v491 = vpop.f32.mrb[0].mxu0
    %v492 = vadd.f32 %v111, %v491
    %v493 = vpop.f32.mrb[0].mxu0
    %494 = vmatprep.mubr.bf16.mxu0 0
    %495 = vmatmul.mubr.bf16.gmra.mrb[0].mxu0 %v310
    %v496 = vpop.f32.mrb[0].mxu0
    %v497 = vadd.f32 %v111, %v496
    %v498 = vpop.f32.mrb[0].mxu0
    %v499 = vpop.f32.mrb[0].mxu0
    %v500 = vadd.f32 %v111, %v499
    %v501 = vpop.f32.mrb[0].mxu0
    %502 = vmatprep.mubr.bf16.mxu0 0
    %503 = vmatmul.mubr.bf16.gmra.mrb[0].mxu0 %v313
    %v504 = vpop.f32.mrb[0].mxu0
    %v505 = vadd.f32 %v111, %v504
    %v506 = vpop.f32.mrb[0].mxu0
    %v507 = vpop.f32.mrb[0].mxu0
    %v508 = vadd.f32 %v111, %v507
    %v509 = vpop.f32.mrb[0].mxu0
    %510 = vmatprep.mubr.bf16.mxu0 0
    %511 = vmatmul.mubr.bf16.gmra.mrb[0].mxu0 %v316
    %v512 = vpop.f32.mrb[0].mxu0
    %v513 = vadd.f32 %v111, %v512
    %v514 = vpop.f32.mrb[0].mxu0
    %v515 = vpop.f32.mrb[0].mxu0
    %v516 = vadd.f32 %v111, %v515
    %v517 = vpop.f32.mrb[0].mxu0
    %518 = vmatprep.mubr.bf16.mxu0 0
    %519 = vmatmul.mubr.bf16.gmra.mrb[0].mxu0 %v319
    %v520 = vpop.f32.mrb[0].mxu0
    %v521 = vadd.f32 %v111, %v520
    %v522 = vpop.f32.mrb[0].mxu0
    %v523 = vpop.f32.mrb[0].mxu0
    %v524 = vadd.f32 %v111, %v523
    %v525 = vpop.f32.mrb[0].mxu0
    %526 = vmatprep.mubr.bf16.mxu0 0
    %527 = vmatmul.mubr.bf16.gmra.mrb[0].mxu0 %v322
    %v528 = vpop.f32.mrb[0].mxu0
    %v529 = vadd.f32 %v111, %v528
    %v530 = vpop.f32.mrb[0].mxu0
    %v531 = vpop.f32.mrb[0].mxu0
    %v532 = vadd.f32 %v111, %v531
    %v533 = vpop.f32.mrb[0].mxu0
    %534 = vmatprep.mubr.bf16.mxu0 0
    %535 = vmatmul.mubr.bf16.gmra.mrb[0].mxu0 %v325
    %v536 = vpop.f32.mrb[0].mxu0
    %v537 = vadd.f32 %v111, %v536
    %v538 = vpop.f32.mrb[0].mxu0
    %v539 = vpop.f32.mrb[0].mxu0
    %v540 = vadd.f32 %v111, %v539
    %v541 = vpop.f32.mrb[0].mxu0
    %542 = vmatprep.mubr.bf16.mxu0 0
    %543 = vmatmul.mubr.bf16.gmra.mrb[0].mxu0 %v328
    %v544 = vpop.f32.mrb[0].mxu0
    %v545 = vadd.f32 %v111, %v544
    %v546 = vpop.f32.mrb[0].mxu0
    %v547 = vpop.f32.mrb[0].mxu0
    %v548 = vadd.f32 %v111, %v547
    %v549 = vpop.f32.mrb[0].mxu0
    %550 = vmatprep.mubr.bf16.mxu0 0
    %551 = vmatmul.mubr.bf16.gmra.mrb[0].mxu0 %v331
    %v552 = vpop.f32.mrb[0].mxu0
    %v553 = vadd.f32 %v111, %v552
    %v554 = vpop.f32.mrb[0].mxu0
    %v555 = vpop.f32.mrb[0].mxu0
    %v556 = vadd.f32 %v111, %v555
    %v557 = vpop.f32.mrb[0].mxu0
    %558 = vmatprep.mubr.bf16.mxu0 0
    %559 = vmatmul.mubr.bf16.gmra.mrb[0].mxu0 %v334
    %v560 = vpop.f32.mrb[0].mxu0
    %v561 = vadd.f32 %v111, %v560
    %v562 = vpop.f32.mrb[0].mxu0
    %v563 = vpop.f32.mrb[0].mxu0
    %v564 = vadd.f32 %v111, %v563
    %v565 = vpop.f32.mrb[0].mxu0
    %566 = vmatprep.mubr.bf16.mxu0 0
    %567 = vmatmul.mubr.bf16.gmra.mrb[0].mxu0 %v337
    %v568 = vpop.f32.mrb[0].mxu0
    %v569 = vadd.f32 %v111, %v568
    %v570 = vpop.f32.mrb[0].mxu0
    %v571 = vpop.f32.mrb[0].mxu0
    %v572 = vadd.f32 %v111, %v571
    %v573 = vpop.f32.mrb[0].mxu0
    %574 = vmatprep.mubr.bf16.mxu0 0
    %575 = vmatmul.mubr.bf16.gmra.mrb[0].mxu0 %v340
    %v576 = vpop.f32.mrb[0].mxu0
    %v577 = vadd.f32 %v111, %v576
    %v578 = vpop.f32.mrb[0].mxu0
    %v579 = vpop.f32.mrb[0].mxu0
    %v580 = vadd.f32 %v111, %v579
    %v581 = vpop.f32.mrb[0].mxu0
    %582 = vmatprep.mubr.bf16.mxu0 0
    %583 = vmatmul.mubr.bf16.gmra.mrb[0].mxu0 %v343
    %v584 = vpop.f32.mrb[0].mxu0
    %v585 = vadd.f32 %v111, %v584
    %v586 = vpop.f32.mrb[0].mxu0
    %v587 = vpop.f32.mrb[0].mxu0
    %v588 = vadd.f32 %v111, %v587
    %v589 = vpop.f32.mrb[0].mxu0
    %590 = vmatprep.mubr.bf16.mxu0 0
    %591 = vmatmul.mubr.bf16.gmra.mrb[0].mxu0 %v346
    %v592 = vpop.f32.mrb[0].mxu0
    %v593 = vadd.f32 %v111, %v592
    %v594 = vpop.f32.mrb[0].mxu0
    %v595 = vpop.f32.mrb[0].mxu0
    %v596 = vadd.f32 %v111, %v595
    %v597 = vpop.f32.mrb[0].mxu0
    %598 = vmatprep.mubr.bf16.mxu0 0
    %599 = vmatmul.mubr.bf16.gmra.mrb[0].mxu0 %v349
    %v600 = vpop.f32.mrb[0].mxu0
    %v601 = vadd.f32 %v111, %v600
    %v602 = vpop.f32.mrb[0].mxu0
    %v603 = vpop.f32.mrb[0].mxu0
    %v604 = vadd.f32 %v111, %v603
    %v605 = vpop.f32.mrb[0].mxu0
    %606 = vmatprep.mubr.bf16.mxu0 0
    %607 = vmatmul.mubr.bf16.gmra.mrb[0].mxu0 %v352
    %v608 = vpop.f32.mrb[0].mxu0
    %v609 = vadd.f32 %v111, %v608
    %v610 = vpop.f32.mrb[0].mxu0
    %v611 = vpop.f32.mrb[0].mxu0
    %v612 = vadd.f32 %v111, %v611
    %v613 = vpop.f32.mrb[0].mxu0
    %614 = vmatprep.mubr.bf16.mxu0 0
    %615 = vmatmul.mubr.bf16.gmra.mrb[0].mxu0 %v355
    %v616 = vpop.f32.mrb[0].mxu0
    %v617 = vadd.f32 %v111, %v616
    %v618 = vpop.f32.mrb[0].mxu0
    %v619 = vpop.f32.mrb[0].mxu0
    %v620 = vadd.f32 %v111, %v619
    %v621 = vpop.f32.mrb[0].mxu0
    %622 = vmatprep.mubr.bf16.mxu0 0
    %623 = vmatmul.mubr.bf16.gmra.mrb[0].mxu0 %v358
    %v624 = vpop.f32.mrb[0].mxu0
    %v625 = vadd.f32 %v111, %v624
    %v626 = vpop.f32.mrb[0].mxu0
    %v627 = vpop.f32.mrb[0].mxu0
    %v628 = vadd.f32 %v111, %v627
    %v629 = vpop.f32.mrb[0].mxu0
    %630 = vmatprep.mubr.bf16.mxu0 0
    %631 = vmatmul.mubr.bf16.gmra.mrb[0].mxu0 %v361
    %v632 = vpop.f32.mrb[0].mxu0
    %v633 = vadd.f32 %v111, %v632
    %v634 = vpop.f32.mrb[0].mxu0
    %v635 = vpop.f32.mrb[0].mxu0
    %v636 = vadd.f32 %v111, %v635
    %v637 = vpop.f32.mrb[0].mxu0
    %638 = vmatprep.mubr.bf16.mxu0 0
    %639 = vmatmul.mubr.bf16.gmra.mrb[0].mxu0 %v364
    %v640 = vpop.f32.mrb[0].mxu0
    %v641 = vadd.f32 %v111, %v640
    %v642 = vpop.f32.mrb[0].mxu0
    %v643 = vpop.f32.mrb[0].mxu0
    %v644 = vadd.f32 %v111, %v643
    %v645 = vpop.f32.mrb[0].mxu0
    %646 = vmatprep.mubr.bf16.mxu0 0
    %647 = vmatmul.mubr.bf16.gmra.mrb[0].mxu0 %v367
    %v648 = vpop.f32.mrb[0].mxu0
    %v649 = vadd.f32 %v111, %v648
    %v650 = vpop.f32.mrb[0].mxu0
    %v651 = vpop.f32.mrb[0].mxu0
    %v652 = vadd.f32 %v111, %v651
    %v653 = vpop.f32.mrb[0].mxu0
    %654 = vmatprep.mubr.bf16.mxu0 0
    %655 = vmatmul.mubr.bf16.gmra.mrb[0].mxu0 %v370
    %v656 = vpop.f32.mrb[0].mxu0
    %v657 = vadd.f32 %v111, %v656
    %v658 = vpop.f32.mrb[0].mxu0
    %v659 = vpop.f32.mrb[0].mxu0
    %v660 = vadd.f32 %v111, %v659
    %v661 = vpop.f32.mrb[0].mxu0
    %662 = vmatprep.mubr.bf16.mxu0 0
    %663 = vmatmul.mubr.bf16.gmra.mrb[0].mxu0 %v373
    %v664 = vpop.f32.mrb[0].mxu0
    %v665 = vadd.f32 %v111, %v664
    %v666 = vpop.f32.mrb[0].mxu0
    %v667 = vpop.f32.mrb[0].mxu0
    %v668 = vadd.f32 %v111, %v667
    %v669 = vpop.f32.mrb[0].mxu0
    %670 = vdwg.mxu0
    %v671 = vmax.f32 %v417, 0.0
    %v672 = vmax.f32 %v420, 0.0
    %v673 = vmax.f32 %v425, 0.0
    %v674 = vmax.f32 %v428, 0.0
    %v675 = vmax.f32 %v433, 0.0
    %v676 = vmax.f32 %v436, 0.0
    %v677 = vmax.f32 %v441, 0.0
    %v678 = vmax.f32 %v444, 0.0
    %v679 = vmax.f32 %v449, 0.0
    %v680 = vmax.f32 %v452, 0.0
    %v681 = vmax.f32 %v457, 0.0
    %v682 = vmax.f32 %v460, 0.0
    %v683 = vmax.f32 %v465, 0.0
    %v684 = vmax.f32 %v468, 0.0
    %v685 = vmax.f32 %v473, 0.0
    %v686 = vmax.f32 %v476, 0.0
    %v687 = vmax.f32 %v481, 0.0
    %v688 = vmax.f32 %v484, 0.0
    %v689 = vmax.f32 %v489, 0.0
    %v690 = vmax.f32 %v492, 0.0
    %v691 = vmax.f32 %v497, 0.0
    %v692 = vmax.f32 %v500, 0.0
    %v693 = vmax.f32 %v505, 0.0
    %v694 = vmax.f32 %v508, 0.0
    %v695 = vmax.f32 %v513, 0.0
    %v696 = vmax.f32 %v516, 0.0
    %v697 = vmax.f32 %v521, 0.0
    %v698 = vmax.f32 %v524, 0.0
    %v699 = vmax.f32 %v529, 0.0
    %v700 = vmax.f32 %v532, 0.0
    %v701 = vmax.f32 %v537, 0.0
    %v702 = vmax.f32 %v540, 0.0
    %v703 = vmax.f32 %v545, 0.0
    %v704 = vmax.f32 %v548, 0.0
    %v705 = vmax.f32 %v553, 0.0
    %v706 = vmax.f32 %v556, 0.0
    %v707 = vmax.f32 %v561, 0.0
    %v708 = vmax.f32 %v564, 0.0
    %v709 = vmax.f32 %v569, 0.0
    %v710 = vmax.f32 %v572, 0.0
    %v711 = vmax.f32 %v577, 0.0
    %v712 = vmax.f32 %v580, 0.0
    %v713 = vmax.f32 %v585, 0.0
    %v714 = vmax.f32 %v588, 0.0
    %v715 = vmax.f32 %v593, 0.0
    %v716 = vmax.f32 %v596, 0.0
    %v717 = vmax.f32 %v601, 0.0
    %v718 = vmax.f32 %v604, 0.0
    %v719 = vmax.f32 %v609, 0.0
    %v720 = vmax.f32 %v612, 0.0
    %v721 = vmax.f32 %v617, 0.0
    %v722 = vmax.f32 %v620, 0.0
    %v723 = vmax.f32 %v625, 0.0
    %v724 = vmax.f32 %v628, 0.0
    %v725 = vmax.f32 %v633, 0.0
    %v726 = vmax.f32 %v636, 0.0
    %v727 = vmax.f32 %v641, 0.0
    %v728 = vmax.f32 %v644, 0.0
    %v729 = vmax.f32 %v649, 0.0
    %v730 = vmax.f32 %v652, 0.0
    %v731 = vmax.f32 %v657, 0.0
    %v732 = vmax.f32 %v660, 0.0
    %v733 = vmax.f32 %v665, 0.0
    %v734 = vmax.f32 %v668, 0.0
    %v735 = vmax.f32 %v671, %v687
    %v736 = vmax.f32 %v672, %v688
    %v737 = vmax.f32 %v673, %v689
    %v738 = vmax.f32 %v674, %v690
    %v739 = vmax.f32 %v675, %v691
    %v740 = vmax.f32 %v676, %v692
    %v741 = vmax.f32 %v677, %v693
    %v742 = vmax.f32 %v678, %v694
    %v743 = vmax.f32 %v679, %v695
    %v744 = vmax.f32 %v680, %v696
    %v745 = vmax.f32 %v681, %v697
    %v746 = vmax.f32 %v682, %v698
    %v747 = vmax.f32 %v683, %v699
    %v748 = vmax.f32 %v684, %v700
    %v749 = vmax.f32 %v685, %v701
    %v750 = vmax.f32 %v686, %v702
    %v751 = vmax.f32 %v703, %v719
    %v752 = vmax.f32 %v704, %v720
    %v753 = vmax.f32 %v705, %v721
    %v754 = vmax.f32 %v706, %v722
    %v755 = vmax.f32 %v707, %v723
    %v756 = vmax.f32 %v708, %v724
    %v757 = vmax.f32 %v709, %v725
    %v758 = vmax.f32 %v710, %v726
    %v759 = vmax.f32 %v711, %v727
    %v760 = vmax.f32 %v712, %v728
    %v761 = vmax.f32 %v713, %v729
    %v762 = vmax.f32 %v714, %v730
    %v763 = vmax.f32 %v715, %v731
    %v764 = vmax.f32 %v716, %v732
    %v765 = vmax.f32 %v717, %v733
    %v766 = vmax.f32 %v718, %v734
    %v767 = vmax.f32 %v735, %v751
    %v768 = vmax.f32 %v736, %v752
    %v769 = vmax.f32 %v737, %v753
    %v770 = vmax.f32 %v738, %v754
    %v771 = vmax.f32 %v739, %v755
    %v772 = vmax.f32 %v740, %v756
    %v773 = vmax.f32 %v741, %v757
    %v774 = vmax.f32 %v742, %v758
    %v775 = vmax.f32 %v743, %v759
    %v776 = vmax.f32 %v744, %v760
    %v777 = vmax.f32 %v745, %v761
    %v778 = vmax.f32 %v746, %v762
    %v779 = vmax.f32 %v747, %v763
    %v780 = vmax.f32 %v748, %v764
    %v781 = vmax.f32 %v749, %v765
    %v782 = vmax.f32 %v750, %v766
    %v783 = vld [vmem:[%s1] sm:$0xff]
    %v784 = vld [vmem:[%s1 + $0x8] sm:$0xff]
    %v785 = vld [vmem:[%s1 + $0x10] sm:$0xff]
    %v786 = vld [vmem:[%s1 + $0x18] sm:$0xff]
    %v787 = vld [vmem:[%s1 + $0x20] sm:$0xff]
    %v788 = vld [vmem:[%s1 + $0x28] sm:$0xff]
    %v789 = vld [vmem:[%s1 + $0x30] sm:$0xff]
    %v790 = vld [vmem:[%s1 + $0x38] sm:$0xff]
    %v791 = vld [vmem:[%s1 + $0x40] sm:$0xff]
    %v792 = vld [vmem:[%s1 + $0x48] sm:$0xff]
    %v793 = vld [vmem:[%s1 + $0x50] sm:$0xff]
    %v794 = vld [vmem:[%s1 + $0x58] sm:$0xff]
    %v795 = vld [vmem:[%s1 + $0x60] sm:$0xff]
    %v796 = vld [vmem:[%s1 + $0x68] sm:$0xff]
    %v797 = vld [vmem:[%s1 + $0x70] sm:$0xff]
    %v798 = vld [vmem:[%s1 + $0x78] sm:$0xff]
    %vm801 = vcmask 1040384
    %v802 = vrot.slane %v781, 7
    %v803 = vrot.slane %v782, 7
    %v804 = vsel %vm801, %v802, %v803
    %v821 = vrot.slane %v767, 7
    %v822 = vrot.slane %v768, 7
    %v823 = vsel %vm801, %v821, %v822
    %v824 = vrot.slane %v769, 7
    %v825 = vsel %vm801, %v822, %v824
    %v826 = vrot.slane %v770, 7
    %v827 = vsel %vm801, %v824, %v826
    %v828 = vrot.slane %v771, 7
    %v829 = vsel %vm801, %v826, %v828
    %v830 = vrot.slane %v772, 7
    %v831 = vsel %vm801, %v828, %v830
    %v832 = vrot.slane %v773, 7
    %v833 = vsel %vm801, %v830, %v832
    %v834 = vrot.slane %v774, 7
    %v835 = vsel %vm801, %v832, %v834
    %v836 = vrot.slane %v775, 7
    %v837 = vsel %vm801, %v834, %v836
    %v838 = vrot.slane %v776, 7
    %v839 = vsel %vm801, %v836, %v838
    %v840 = vrot.slane %v777, 7
    %v841 = vsel %vm801, %v838, %v840
    %v842 = vrot.slane %v778, 7
    %v843 = vsel %vm801, %v840, %v842
    %v844 = vrot.slane %v779, 7
    %v845 = vsel %vm801, %v842, %v844
    %v846 = vrot.slane %v780, 7
    %v847 = vsel %vm801, %v844, %v846
    %v848 = vsel %vm801, %v846, %v802
    %v864 = vsel %vm801, %v803, %v821
    %866 = vset.pattern.permute.xlu0 0
    %867 = vperm.xlu0 %866, %v783
    %v868 = vpop.permute.xlu0 %867
    %871 = vset.pattern.permute.xlu0 0
    %872 = vperm.xlu0 %871, %v784
    %v873 = vpop.permute.xlu0 %872
    %876 = vset.pattern.permute.xlu0 0
    %877 = vperm.xlu0 %876, %v785
    %v878 = vpop.permute.xlu0 %877
    %881 = vset.pattern.permute.xlu0 0
    %882 = vperm.xlu0 %881, %v786
    %v883 = vpop.permute.xlu0 %882
    %886 = vset.pattern.permute.xlu0 0
    %887 = vperm.xlu0 %886, %v787
    %v888 = vpop.permute.xlu0 %887
    %891 = vset.pattern.permute.xlu0 0
    %892 = vperm.xlu0 %891, %v788
    %v893 = vpop.permute.xlu0 %892
    %896 = vset.pattern.permute.xlu0 0
    %897 = vperm.xlu0 %896, %v789
    %v898 = vpop.permute.xlu0 %897
    %901 = vset.pattern.permute.xlu0 0
    %902 = vperm.xlu0 %901, %v790
    %v903 = vpop.permute.xlu0 %902
    %906 = vset.pattern.permute.xlu0 0
    %907 = vperm.xlu0 %906, %v791
    %v908 = vpop.permute.xlu0 %907
    %911 = vset.pattern.permute.xlu0 0
    %912 = vperm.xlu0 %911, %v792
    %v913 = vpop.permute.xlu0 %912
    %916 = vset.pattern.permute.xlu0 0
    %917 = vperm.xlu0 %916, %v793
    %v918 = vpop.permute.xlu0 %917
    %921 = vset.pattern.permute.xlu0 0
    %922 = vperm.xlu0 %921, %v794
    %v923 = vpop.permute.xlu0 %922
    %926 = vset.pattern.permute.xlu0 0
    %927 = vperm.xlu0 %926, %v795
    %v928 = vpop.permute.xlu0 %927
    %931 = vset.pattern.permute.xlu0 0
    %932 = vperm.xlu0 %931, %v796
    %v933 = vpop.permute.xlu0 %932
    %936 = vset.pattern.permute.xlu0 0
    %937 = vperm.xlu0 %936, %v797
    %v938 = vpop.permute.xlu0 %937
    %941 = vset.pattern.permute.xlu0 0
    %942 = vperm.xlu0 %941, %v798
    %v943 = vpop.permute.xlu0 %942
    %v945 = vmul.f32 %v804, %v868
    %v946 = vmul.f32 %v864, %v873
    %v947 = vmul.f32 %v823, %v878
    %v948 = vmul.f32 %v825, %v883
    %v949 = vmul.f32 %v827, %v888
    %v950 = vmul.f32 %v829, %v893
    %v951 = vmul.f32 %v831, %v898
    %v952 = vmul.f32 %v833, %v903
    %v953 = vmul.f32 %v835, %v908
    %v954 = vmul.f32 %v837, %v913
    %v955 = vmul.f32 %v839, %v918
    %v956 = vmul.f32 %v841, %v923
    %v957 = vmul.f32 %v843, %v928
    %v958 = vmul.f32 %v845, %v933
    %v959 = vmul.f32 %v847, %v938
    %v960 = vmul.f32 %v848, %v943
    %961 = vset.pattern.permute.xlu0 1
    %962 = vperm.xlu0 %961, %v783
    %v963 = vpop.permute.xlu0 %962
    %965 = vset.pattern.permute.xlu0 1
    %966 = vperm.xlu0 %965, %v784
    %v967 = vpop.permute.xlu0 %966
    %969 = vset.pattern.permute.xlu0 1
    %970 = vperm.xlu0 %969, %v785
    %v971 = vpop.permute.xlu0 %970
    %973 = vset.pattern.permute.xlu0 1
    %974 = vperm.xlu0 %973, %v786
    %v975 = vpop.permute.xlu0 %974
    %977 = vset.pattern.permute.xlu0 1
    %978 = vperm.xlu0 %977, %v787
    %v979 = vpop.permute.xlu0 %978
    %981 = vset.pattern.permute.xlu0 1
    %982 = vperm.xlu0 %981, %v788
    %v983 = vpop.permute.xlu0 %982
    %985 = vset.pattern.permute.xlu0 1
    %986 = vperm.xlu0 %985, %v789
    %v987 = vpop.permute.xlu0 %986
    %989 = vset.pattern.permute.xlu0 1
    %990 = vperm.xlu0 %989, %v790
    %v991 = vpop.permute.xlu0 %990
    %993 = vset.pattern.permute.xlu0 1
    %994 = vperm.xlu0 %993, %v791
    %v995 = vpop.permute.xlu0 %994
    %997 = vset.pattern.permute.xlu0 1
    %998 = vperm.xlu0 %997, %v792
    %v999 = vpop.permute.xlu0 %998
    %1001 = vset.pattern.permute.xlu0 1
    %1002 = vperm.xlu0 %1001, %v793
    %v1003 = vpop.permute.xlu0 %1002
    %1005 = vset.pattern.permute.xlu0 1
    %1006 = vperm.xlu0 %1005, %v794
    %v1007 = vpop.permute.xlu0 %1006
    %1009 = vset.pattern.permute.xlu0 1
    %1010 = vperm.xlu0 %1009, %v795
    %v1011 = vpop.permute.xlu0 %1010
    %1013 = vset.pattern.permute.xlu0 1
    %1014 = vperm.xlu0 %1013, %v796
    %v1015 = vpop.permute.xlu0 %1014
    %1017 = vset.pattern.permute.xlu0 1
    %1018 = vperm.xlu0 %1017, %v797
    %v1019 = vpop.permute.xlu0 %1018
    %1021 = vset.pattern.permute.xlu0 1
    %1022 = vperm.xlu0 %1021, %v798
    %v1023 = vpop.permute.xlu0 %1022
    %v1025 = vmul.f32 %v782, %v963
    %v1026 = vmul.f32 %v767, %v967
    %v1027 = vmul.f32 %v768, %v971
    %v1028 = vmul.f32 %v769, %v975
    %v1029 = vmul.f32 %v770, %v979
    %v1030 = vmul.f32 %v771, %v983
    %v1031 = vmul.f32 %v772, %v987
    %v1032 = vmul.f32 %v773, %v991
    %v1033 = vmul.f32 %v774, %v995
    %v1034 = vmul.f32 %v775, %v999
    %v1035 = vmul.f32 %v776, %v1003
    %v1036 = vmul.f32 %v777, %v1007
    %v1037 = vmul.f32 %v778, %v1011
    %v1038 = vmul.f32 %v779, %v1015
    %v1039 = vmul.f32 %v780, %v1019
    %v1040 = vmul.f32 %v781, %v1023
    %v1041 = vrot.slane %v782, 1
    %vm1043 = vcmask 1046528
    %v1044 = vrot.slane %v767, 1
    %v1045 = vrot.slane %v768, 1
    %v1046 = vsel %vm1043, %v1044, %v1045
    %v1047 = vrot.slane %v769, 1
    %v1048 = vsel %vm1043, %v1045, %v1047
    %v1049 = vrot.slane %v770, 1
    %v1050 = vsel %vm1043, %v1047, %v1049
    %v1051 = vrot.slane %v771, 1
    %v1052 = vsel %vm1043, %v1049, %v1051
    %v1053 = vrot.slane %v772, 1
    %v1054 = vsel %vm1043, %v1051, %v1053
    %v1055 = vrot.slane %v773, 1
    %v1056 = vsel %vm1043, %v1053, %v1055
    %v1057 = vrot.slane %v774, 1
    %v1058 = vsel %vm1043, %v1055, %v1057
    %v1059 = vrot.slane %v775, 1
    %v1060 = vsel %vm1043, %v1057, %v1059
    %v1061 = vrot.slane %v776, 1
    %v1062 = vsel %vm1043, %v1059, %v1061
    %v1063 = vrot.slane %v777, 1
    %v1064 = vsel %vm1043, %v1061, %v1063
    %v1065 = vrot.slane %v778, 1
    %v1066 = vsel %vm1043, %v1063, %v1065
    %v1067 = vrot.slane %v779, 1
    %v1068 = vsel %vm1043, %v1065, %v1067
    %v1069 = vrot.slane %v780, 1
    %v1070 = vsel %vm1043, %v1067, %v1069
    %v1071 = vrot.slane %v781, 1
    %v1072 = vsel %vm1043, %v1069, %v1071
    %v1073 = vsel %vm1043, %v1071, %v1041
    %v1090 = vsel %vm1043, %v1041, %v1044
    %1091 = vset.pattern.permute.xlu0 2
    %1092 = vperm.xlu0 %1091, %v783
    %v1093 = vpop.permute.xlu0 %1092
    %1095 = vset.pattern.permute.xlu0 2
    %1096 = vperm.xlu0 %1095, %v784
    %v1097 = vpop.permute.xlu0 %1096
    %1099 = vset.pattern.permute.xlu0 2
    %1100 = vperm.xlu0 %1099, %v785
    %v1101 = vpop.permute.xlu0 %1100
    %1103 = vset.pattern.permute.xlu0 2
    %1104 = vperm.xlu0 %1103, %v786
    %v1105 = vpop.permute.xlu0 %1104
    %1107 = vset.pattern.permute.xlu0 2
    %1108 = vperm.xlu0 %1107, %v787
    %v1109 = vpop.permute.xlu0 %1108
    %1111 = vset.pattern.permute.xlu0 2
    %1112 = vperm.xlu0 %1111, %v788
    %v1113 = vpop.permute.xlu0 %1112
    %1115 = vset.pattern.permute.xlu0 2
    %1116 = vperm.xlu0 %1115, %v789
    %v1117 = vpop.permute.xlu0 %1116
    %1119 = vset.pattern.permute.xlu0 2
    %1120 = vperm.xlu0 %1119, %v790
    %v1121 = vpop.permute.xlu0 %1120
    %1123 = vset.pattern.permute.xlu0 2
    %1124 = vperm.xlu0 %1123, %v791
    %v1125 = vpop.permute.xlu0 %1124
    %1127 = vset.pattern.permute.xlu0 2
    %1128 = vperm.xlu0 %1127, %v792
    %v1129 = vpop.permute.xlu0 %1128
    %1131 = vset.pattern.permute.xlu0 2
    %1132 = vperm.xlu0 %1131, %v793
    %v1133 = vpop.permute.xlu0 %1132
    %1135 = vset.pattern.permute.xlu0 2
    %1136 = vperm.xlu0 %1135, %v794
    %v1137 = vpop.permute.xlu0 %1136
    %1139 = vset.pattern.permute.xlu0 2
    %1140 = vperm.xlu0 %1139, %v795
    %v1141 = vpop.permute.xlu0 %1140
    %1143 = vset.pattern.permute.xlu0 2
    %1144 = vperm.xlu0 %1143, %v796
    %v1145 = vpop.permute.xlu0 %1144
    %1147 = vset.pattern.permute.xlu0 2
    %1148 = vperm.xlu0 %1147, %v797
    %v1149 = vpop.permute.xlu0 %1148
    %1151 = vset.pattern.permute.xlu0 2
    %1152 = vperm.xlu0 %1151, %v798
    %v1153 = vpop.permute.xlu0 %1152
    %v1155 = vmul.f32 %v1090, %v1093
    %v1156 = vmul.f32 %v1046, %v1097
    %v1157 = vmul.f32 %v1048, %v1101
    %v1158 = vmul.f32 %v1050, %v1105
    %v1159 = vmul.f32 %v1052, %v1109
    %v1160 = vmul.f32 %v1054, %v1113
    %v1161 = vmul.f32 %v1056, %v1117
    %v1162 = vmul.f32 %v1058, %v1121
    %v1163 = vmul.f32 %v1060, %v1125
    %v1164 = vmul.f32 %v1062, %v1129
    %v1165 = vmul.f32 %v1064, %v1133
    %v1166 = vmul.f32 %v1066, %v1137
    %v1167 = vmul.f32 %v1068, %v1141
    %v1168 = vmul.f32 %v1070, %v1145
    %v1169 = vmul.f32 %v1072, %v1149
    %v1170 = vmul.f32 %v1073, %v1153
    %1171 = vset.pattern.permute.xlu0 3
    %1172 = vperm.xlu0 %1171, %v783
    %v1173 = vpop.permute.xlu0 %1172
    %1175 = vset.pattern.permute.xlu0 3
    %1176 = vperm.xlu0 %1175, %v784
    %v1177 = vpop.permute.xlu0 %1176
    %1179 = vset.pattern.permute.xlu0 3
    %1180 = vperm.xlu0 %1179, %v785
    %v1181 = vpop.permute.xlu0 %1180
    %1183 = vset.pattern.permute.xlu0 3
    %1184 = vperm.xlu0 %1183, %v786
    %v1185 = vpop.permute.xlu0 %1184
    %1187 = vset.pattern.permute.xlu0 3
    %1188 = vperm.xlu0 %1187, %v787
    %v1189 = vpop.permute.xlu0 %1188
    %1191 = vset.pattern.permute.xlu0 3
    %1192 = vperm.xlu0 %1191, %v788
    %v1193 = vpop.permute.xlu0 %1192
    %1195 = vset.pattern.permute.xlu0 3
    %1196 = vperm.xlu0 %1195, %v789
    %v1197 = vpop.permute.xlu0 %1196
    %1199 = vset.pattern.permute.xlu0 3
    %1200 = vperm.xlu0 %1199, %v790
    %v1201 = vpop.permute.xlu0 %1200
    %1203 = vset.pattern.permute.xlu0 3
    %1204 = vperm.xlu0 %1203, %v791
    %v1205 = vpop.permute.xlu0 %1204
    %1207 = vset.pattern.permute.xlu0 3
    %1208 = vperm.xlu0 %1207, %v792
    %v1209 = vpop.permute.xlu0 %1208
    %1211 = vset.pattern.permute.xlu0 3
    %1212 = vperm.xlu0 %1211, %v793
    %v1213 = vpop.permute.xlu0 %1212
    %1215 = vset.pattern.permute.xlu0 3
    %1216 = vperm.xlu0 %1215, %v794
    %v1217 = vpop.permute.xlu0 %1216
    %1219 = vset.pattern.permute.xlu0 3
    %1220 = vperm.xlu0 %1219, %v795
    %v1221 = vpop.permute.xlu0 %1220
    %1223 = vset.pattern.permute.xlu0 3
    %1224 = vperm.xlu0 %1223, %v796
    %v1225 = vpop.permute.xlu0 %1224
    %1227 = vset.pattern.permute.xlu0 3
    %1228 = vperm.xlu0 %1227, %v797
    %v1229 = vpop.permute.xlu0 %1228
    %1231 = vset.pattern.permute.xlu0 3
    %1232 = vperm.xlu0 %1231, %v798
    %v1233 = vpop.permute.xlu0 %1232
    %v1235 = vmul.f32 %v864, %v1173
    %v1236 = vmul.f32 %v823, %v1177
    %v1237 = vmul.f32 %v825, %v1181
    %v1238 = vmul.f32 %v827, %v1185
    %v1239 = vmul.f32 %v829, %v1189
    %v1240 = vmul.f32 %v831, %v1193
    %v1241 = vmul.f32 %v833, %v1197
    %v1242 = vmul.f32 %v835, %v1201
    %v1243 = vmul.f32 %v837, %v1205
    %v1244 = vmul.f32 %v839, %v1209
    %v1245 = vmul.f32 %v841, %v1213
    %v1246 = vmul.f32 %v843, %v1217
    %v1247 = vmul.f32 %v845, %v1221
    %v1248 = vmul.f32 %v847, %v1225
    %v1249 = vmul.f32 %v848, %v1229
    %v1250 = vmul.f32 %v804, %v1233
    %1251 = vset.pattern.permute.xlu0 5
    %1252 = vperm.xlu0 %1251, %v783
    %v1253 = vpop.permute.xlu0 %1252
    %1255 = vset.pattern.permute.xlu0 5
    %1256 = vperm.xlu0 %1255, %v784
    %v1257 = vpop.permute.xlu0 %1256
    %1259 = vset.pattern.permute.xlu0 5
    %1260 = vperm.xlu0 %1259, %v785
    %v1261 = vpop.permute.xlu0 %1260
    %1263 = vset.pattern.permute.xlu0 5
    %1264 = vperm.xlu0 %1263, %v786
    %v1265 = vpop.permute.xlu0 %1264
    %1267 = vset.pattern.permute.xlu0 5
    %1268 = vperm.xlu0 %1267, %v787
    %v1269 = vpop.permute.xlu0 %1268
    %1271 = vset.pattern.permute.xlu0 5
    %1272 = vperm.xlu0 %1271, %v788
    %v1273 = vpop.permute.xlu0 %1272
    %1275 = vset.pattern.permute.xlu0 5
    %1276 = vperm.xlu0 %1275, %v789
    %v1277 = vpop.permute.xlu0 %1276
    %1279 = vset.pattern.permute.xlu0 5
    %1280 = vperm.xlu0 %1279, %v790
    %v1281 = vpop.permute.xlu0 %1280
    %1283 = vset.pattern.permute.xlu0 5
    %1284 = vperm.xlu0 %1283, %v791
    %v1285 = vpop.permute.xlu0 %1284
    %1287 = vset.pattern.permute.xlu0 5
    %1288 = vperm.xlu0 %1287, %v792
    %v1289 = vpop.permute.xlu0 %1288
    %1291 = vset.pattern.permute.xlu0 5
    %1292 = vperm.xlu0 %1291, %v793
    %v1293 = vpop.permute.xlu0 %1292
    %1295 = vset.pattern.permute.xlu0 5
    %1296 = vperm.xlu0 %1295, %v794
    %v1297 = vpop.permute.xlu0 %1296
    %1299 = vset.pattern.permute.xlu0 5
    %1300 = vperm.xlu0 %1299, %v795
    %v1301 = vpop.permute.xlu0 %1300
    %1303 = vset.pattern.permute.xlu0 5
    %1304 = vperm.xlu0 %1303, %v796
    %v1305 = vpop.permute.xlu0 %1304
    %1307 = vset.pattern.permute.xlu0 5
    %1308 = vperm.xlu0 %1307, %v797
    %v1309 = vpop.permute.xlu0 %1308
    %1311 = vset.pattern.permute.xlu0 5
    %1312 = vperm.xlu0 %1311, %v798
    %v1313 = vpop.permute.xlu0 %1312
    %v1315 = vmul.f32 %v1046, %v1253
    %v1316 = vmul.f32 %v1048, %v1257
    %v1317 = vmul.f32 %v1050, %v1261
    %v1318 = vmul.f32 %v1052, %v1265
    %v1319 = vmul.f32 %v1054, %v1269
    %v1320 = vmul.f32 %v1056, %v1273
    %v1321 = vmul.f32 %v1058, %v1277
    %v1322 = vmul.f32 %v1060, %v1281
    %v1323 = vmul.f32 %v1062, %v1285
    %v1324 = vmul.f32 %v1064, %v1289
    %v1325 = vmul.f32 %v1066, %v1293
    %v1326 = vmul.f32 %v1068, %v1297
    %v1327 = vmul.f32 %v1070, %v1301
    %v1328 = vmul.f32 %v1072, %v1305
    %v1329 = vmul.f32 %v1073, %v1309
    %v1330 = vmul.f32 %v1090, %v1313
    %1331 = vset.pattern.permute.xlu0 6
    %1332 = vperm.xlu0 %1331, %v783
    %v1333 = vpop.permute.xlu0 %1332
    %1335 = vset.pattern.permute.xlu0 6
    %1336 = vperm.xlu0 %1335, %v784
    %v1337 = vpop.permute.xlu0 %1336
    %1339 = vset.pattern.permute.xlu0 6
    %1340 = vperm.xlu0 %1339, %v785
    %v1341 = vpop.permute.xlu0 %1340
    %1343 = vset.pattern.permute.xlu0 6
    %1344 = vperm.xlu0 %1343, %v786
    %v1345 = vpop.permute.xlu0 %1344
    %1347 = vset.pattern.permute.xlu0 6
    %1348 = vperm.xlu0 %1347, %v787
    %v1349 = vpop.permute.xlu0 %1348
    %1351 = vset.pattern.permute.xlu0 6
    %1352 = vperm.xlu0 %1351, %v788
    %v1353 = vpop.permute.xlu0 %1352
    %1355 = vset.pattern.permute.xlu0 6
    %1356 = vperm.xlu0 %1355, %v789
    %v1357 = vpop.permute.xlu0 %1356
    %1359 = vset.pattern.permute.xlu0 6
    %1360 = vperm.xlu0 %1359, %v790
    %v1361 = vpop.permute.xlu0 %1360
    %1363 = vset.pattern.permute.xlu0 6
    %1364 = vperm.xlu0 %1363, %v791
    %v1365 = vpop.permute.xlu0 %1364
    %1367 = vset.pattern.permute.xlu0 6
    %1368 = vperm.xlu0 %1367, %v792
    %v1369 = vpop.permute.xlu0 %1368
    %1371 = vset.pattern.permute.xlu0 6
    %1372 = vperm.xlu0 %1371, %v793
    %v1373 = vpop.permute.xlu0 %1372
    %1375 = vset.pattern.permute.xlu0 6
    %1376 = vperm.xlu0 %1375, %v794
    %v1377 = vpop.permute.xlu0 %1376
    %1379 = vset.pattern.permute.xlu0 6
    %1380 = vperm.xlu0 %1379, %v795
    %v1381 = vpop.permute.xlu0 %1380
    %1383 = vset.pattern.permute.xlu0 6
    %1384 = vperm.xlu0 %1383, %v796
    %v1385 = vpop.permute.xlu0 %1384
    %1387 = vset.pattern.permute.xlu0 6
    %1388 = vperm.xlu0 %1387, %v797
    %v1389 = vpop.permute.xlu0 %1388
    %1391 = vset.pattern.permute.xlu0 6
    %1392 = vperm.xlu0 %1391, %v798
    %v1393 = vpop.permute.xlu0 %1392
    %v1395 = vmul.f32 %v823, %v1333
    %v1396 = vmul.f32 %v825, %v1337
    %v1397 = vmul.f32 %v827, %v1341
    %v1398 = vmul.f32 %v829, %v1345
    %v1399 = vmul.f32 %v831, %v1349
    %v1400 = vmul.f32 %v833, %v1353
    %v1401 = vmul.f32 %v835, %v1357
    %v1402 = vmul.f32 %v837, %v1361
    %v1403 = vmul.f32 %v839, %v1365
    %v1404 = vmul.f32 %v841, %v1369
    %v1405 = vmul.f32 %v843, %v1373
    %v1406 = vmul.f32 %v845, %v1377
    %v1407 = vmul.f32 %v847, %v1381
    %v1408 = vmul.f32 %v848, %v1385
    %v1409 = vmul.f32 %v804, %v1389
    %v1410 = vmul.f32 %v864, %v1393
    %1411 = vset.pattern.permute.xlu0 7
    %1412 = vperm.xlu0 %1411, %v783
    %v1413 = vpop.permute.xlu0 %1412
    %1415 = vset.pattern.permute.xlu0 7
    %1416 = vperm.xlu0 %1415, %v784
    %v1417 = vpop.permute.xlu0 %1416
    %1419 = vset.pattern.permute.xlu0 7
    %1420 = vperm.xlu0 %1419, %v785
    %v1421 = vpop.permute.xlu0 %1420
    %1423 = vset.pattern.permute.xlu0 7
    %1424 = vperm.xlu0 %1423, %v786
    %v1425 = vpop.permute.xlu0 %1424
    %1427 = vset.pattern.permute.xlu0 7
    %1428 = vperm.xlu0 %1427, %v787
    %v1429 = vpop.permute.xlu0 %1428
    %1431 = vset.pattern.permute.xlu0 7
    %1432 = vperm.xlu0 %1431, %v788
    %v1433 = vpop.permute.xlu0 %1432
    %1435 = vset.pattern.permute.xlu0 7
    %1436 = vperm.xlu0 %1435, %v789
    %v1437 = vpop.permute.xlu0 %1436
    %1439 = vset.pattern.permute.xlu0 7
    %1440 = vperm.xlu0 %1439, %v790
    %v1441 = vpop.permute.xlu0 %1440
    %1443 = vset.pattern.permute.xlu0 7
    %1444 = vperm.xlu0 %1443, %v791
    %v1445 = vpop.permute.xlu0 %1444
    %1447 = vset.pattern.permute.xlu0 7
    %1448 = vperm.xlu0 %1447, %v792
    %v1449 = vpop.permute.xlu0 %1448
    %1451 = vset.pattern.permute.xlu0 7
    %1452 = vperm.xlu0 %1451, %v793
    %v1453 = vpop.permute.xlu0 %1452
    %1455 = vset.pattern.permute.xlu0 7
    %1456 = vperm.xlu0 %1455, %v794
    %v1457 = vpop.permute.xlu0 %1456
    %1459 = vset.pattern.permute.xlu0 7
    %1460 = vperm.xlu0 %1459, %v795
    %v1461 = vpop.permute.xlu0 %1460
    %1463 = vset.pattern.permute.xlu0 7
    %1464 = vperm.xlu0 %1463, %v796
    %v1465 = vpop.permute.xlu0 %1464
    %1467 = vset.pattern.permute.xlu0 7
    %1468 = vperm.xlu0 %1467, %v797
    %v1469 = vpop.permute.xlu0 %1468
    %1471 = vset.pattern.permute.xlu0 7
    %1472 = vperm.xlu0 %1471, %v798
    %v1473 = vpop.permute.xlu0 %1472
    %v1475 = vmul.f32 %v768, %v1413
    %v1476 = vmul.f32 %v769, %v1417
    %v1477 = vmul.f32 %v770, %v1421
    %v1478 = vmul.f32 %v771, %v1425
    %v1479 = vmul.f32 %v772, %v1429
    %v1480 = vmul.f32 %v773, %v1433
    %v1481 = vmul.f32 %v774, %v1437
    %v1482 = vmul.f32 %v775, %v1441
    %v1483 = vmul.f32 %v776, %v1445
    %v1484 = vmul.f32 %v777, %v1449
    %v1485 = vmul.f32 %v778, %v1453
    %v1486 = vmul.f32 %v779, %v1457
    %v1487 = vmul.f32 %v780, %v1461
    %v1488 = vmul.f32 %v781, %v1465
    %v1489 = vmul.f32 %v782, %v1469
    %v1490 = vmul.f32 %v767, %v1473
    %1491 = vset.pattern.permute.xlu0 8
    %1492 = vperm.xlu0 %1491, %v783
    %v1493 = vpop.permute.xlu0 %1492
    %1495 = vset.pattern.permute.xlu0 8
    %1496 = vperm.xlu0 %1495, %v784
    %v1497 = vpop.permute.xlu0 %1496
    %1499 = vset.pattern.permute.xlu0 8
    %1500 = vperm.xlu0 %1499, %v785
    %v1501 = vpop.permute.xlu0 %1500
    %1503 = vset.pattern.permute.xlu0 8
    %1504 = vperm.xlu0 %1503, %v786
    %v1505 = vpop.permute.xlu0 %1504
    %1507 = vset.pattern.permute.xlu0 8
    %1508 = vperm.xlu0 %1507, %v787
    %v1509 = vpop.permute.xlu0 %1508
    %1511 = vset.pattern.permute.xlu0 8
    %1512 = vperm.xlu0 %1511, %v788
    %v1513 = vpop.permute.xlu0 %1512
    %1515 = vset.pattern.permute.xlu0 8
    %1516 = vperm.xlu0 %1515, %v789
    %v1517 = vpop.permute.xlu0 %1516
    %1519 = vset.pattern.permute.xlu0 8
    %1520 = vperm.xlu0 %1519, %v790
    %v1521 = vpop.permute.xlu0 %1520
    %1523 = vset.pattern.permute.xlu0 8
    %1524 = vperm.xlu0 %1523, %v791
    %v1525 = vpop.permute.xlu0 %1524
    %1527 = vset.pattern.permute.xlu0 8
    %1528 = vperm.xlu0 %1527, %v792
    %v1529 = vpop.permute.xlu0 %1528
    %1531 = vset.pattern.permute.xlu0 8
    %1532 = vperm.xlu0 %1531, %v793
    %v1533 = vpop.permute.xlu0 %1532
    %1535 = vset.pattern.permute.xlu0 8
    %1536 = vperm.xlu0 %1535, %v794
    %v1537 = vpop.permute.xlu0 %1536
    %1539 = vset.pattern.permute.xlu0 8
    %1540 = vperm.xlu0 %1539, %v795
    %v1541 = vpop.permute.xlu0 %1540
    %1543 = vset.pattern.permute.xlu0 8
    %1544 = vperm.xlu0 %1543, %v796
    %v1545 = vpop.permute.xlu0 %1544
    %1547 = vset.pattern.permute.xlu0 8
    %1548 = vperm.xlu0 %1547, %v797
    %v1549 = vpop.permute.xlu0 %1548
    %1551 = vset.pattern.permute.xlu0 8
    %1552 = vperm.xlu0 %1551, %v798
    %v1553 = vpop.permute.xlu0 %1552
    %v1555 = vmul.f32 %v1048, %v1493
    %v1556 = vmul.f32 %v1050, %v1497
    %v1557 = vmul.f32 %v1052, %v1501
    %v1558 = vmul.f32 %v1054, %v1505
    %v1559 = vmul.f32 %v1056, %v1509
    %v1560 = vmul.f32 %v1058, %v1513
    %v1561 = vmul.f32 %v1060, %v1517
    %v1562 = vmul.f32 %v1062, %v1521
    %v1563 = vmul.f32 %v1064, %v1525
    %v1564 = vmul.f32 %v1066, %v1529
    %v1565 = vmul.f32 %v1068, %v1533
    %v1566 = vmul.f32 %v1070, %v1537
    %v1567 = vmul.f32 %v1072, %v1541
    %v1568 = vmul.f32 %v1073, %v1545
    %v1569 = vmul.f32 %v1090, %v1549
    %v1570 = vmul.f32 %v1046, %v1553
    %1587 = vrot.lane.b32.xlu0 %v1025, 16
    %v1588 = vpop.permute.xlu0 %1587
    %1589 = vrot.lane.b32.xlu0 %v1026, 16
    %v1590 = vpop.permute.xlu0 %1589
    %1591 = vrot.lane.b32.xlu0 %v1027, 16
    %v1592 = vpop.permute.xlu0 %1591
    %1593 = vrot.lane.b32.xlu0 %v1028, 16
    %v1594 = vpop.permute.xlu0 %1593
    %1595 = vrot.lane.b32.xlu0 %v1029, 16
    %v1596 = vpop.permute.xlu0 %1595
    %1597 = vrot.lane.b32.xlu0 %v1030, 16
    %v1598 = vpop.permute.xlu0 %1597
    %1599 = vrot.lane.b32.xlu0 %v1031, 16
    %v1600 = vpop.permute.xlu0 %1599
    %1601 = vrot.lane.b32.xlu0 %v1032, 16
    %v1602 = vpop.permute.xlu0 %1601
    %1603 = vrot.lane.b32.xlu0 %v1033, 16
    %v1604 = vpop.permute.xlu0 %1603
    %1605 = vrot.lane.b32.xlu0 %v1034, 16
    %v1606 = vpop.permute.xlu0 %1605
    %1607 = vrot.lane.b32.xlu0 %v1035, 16
    %v1608 = vpop.permute.xlu0 %1607
    %1609 = vrot.lane.b32.xlu0 %v1036, 16
    %v1610 = vpop.permute.xlu0 %1609
    %1611 = vrot.lane.b32.xlu0 %v1037, 16
    %v1612 = vpop.permute.xlu0 %1611
    %1613 = vrot.lane.b32.xlu0 %v1038, 16
    %v1614 = vpop.permute.xlu0 %1613
    %1615 = vrot.lane.b32.xlu0 %v1039, 16
    %v1616 = vpop.permute.xlu0 %1615
    %1617 = vrot.lane.b32.xlu0 %v1040, 16
    %v1618 = vpop.permute.xlu0 %1617
    %1651 = vrot.lane.b32.xlu0 %v1155, 32
    %v1652 = vpop.permute.xlu0 %1651
    %1653 = vrot.lane.b32.xlu0 %v1156, 32
    %v1654 = vpop.permute.xlu0 %1653
    %1655 = vrot.lane.b32.xlu0 %v1157, 32
    %v1656 = vpop.permute.xlu0 %1655
    %1657 = vrot.lane.b32.xlu0 %v1158, 32
    %v1658 = vpop.permute.xlu0 %1657
    %1659 = vrot.lane.b32.xlu0 %v1159, 32
    %v1660 = vpop.permute.xlu0 %1659
    %1661 = vrot.lane.b32.xlu0 %v1160, 32
    %v1662 = vpop.permute.xlu0 %1661
    %1663 = vrot.lane.b32.xlu0 %v1161, 32
    %v1664 = vpop.permute.xlu0 %1663
    %1665 = vrot.lane.b32.xlu0 %v1162, 32
    %v1666 = vpop.permute.xlu0 %1665
    %1667 = vrot.lane.b32.xlu0 %v1163, 32
    %v1668 = vpop.permute.xlu0 %1667
    %1669 = vrot.lane.b32.xlu0 %v1164, 32
    %v1670 = vpop.permute.xlu0 %1669
    %1671 = vrot.lane.b32.xlu0 %v1165, 32
    %v1672 = vpop.permute.xlu0 %1671
    %1673 = vrot.lane.b32.xlu0 %v1166, 32
    %v1674 = vpop.permute.xlu0 %1673
    %1675 = vrot.lane.b32.xlu0 %v1167, 32
    %v1676 = vpop.permute.xlu0 %1675
    %1677 = vrot.lane.b32.xlu0 %v1168, 32
    %v1678 = vpop.permute.xlu0 %1677
    %1679 = vrot.lane.b32.xlu0 %v1169, 32
    %v1680 = vpop.permute.xlu0 %1679
    %1681 = vrot.lane.b32.xlu0 %v1170, 32
    %v1682 = vpop.permute.xlu0 %1681
    %1715 = vrot.lane.b32.xlu0 %v1235, 48
    %v1716 = vpop.permute.xlu0 %1715
    %1717 = vrot.lane.b32.xlu0 %v1236, 48
    %v1718 = vpop.permute.xlu0 %1717
    %1719 = vrot.lane.b32.xlu0 %v1237, 48
    %v1720 = vpop.permute.xlu0 %1719
    %1721 = vrot.lane.b32.xlu0 %v1238, 48
    %v1722 = vpop.permute.xlu0 %1721
    %1723 = vrot.lane.b32.xlu0 %v1239, 48
    %v1724 = vpop.permute.xlu0 %1723
    %1725 = vrot.lane.b32.xlu0 %v1240, 48
    %v1726 = vpop.permute.xlu0 %1725
    %1727 = vrot.lane.b32.xlu0 %v1241, 48
    %v1728 = vpop.permute.xlu0 %1727
    %1729 = vrot.lane.b32.xlu0 %v1242, 48
    %v1730 = vpop.permute.xlu0 %1729
    %1731 = vrot.lane.b32.xlu0 %v1243, 48
    %v1732 = vpop.permute.xlu0 %1731
    %1733 = vrot.lane.b32.xlu0 %v1244, 48
    %v1734 = vpop.permute.xlu0 %1733
    %1735 = vrot.lane.b32.xlu0 %v1245, 48
    %v1736 = vpop.permute.xlu0 %1735
    %1737 = vrot.lane.b32.xlu0 %v1246, 48
    %v1738 = vpop.permute.xlu0 %1737
    %1739 = vrot.lane.b32.xlu0 %v1247, 48
    %v1740 = vpop.permute.xlu0 %1739
    %1741 = vrot.lane.b32.xlu0 %v1248, 48
    %v1742 = vpop.permute.xlu0 %1741
    %1743 = vrot.lane.b32.xlu0 %v1249, 48
    %v1744 = vpop.permute.xlu0 %1743
    %1745 = vrot.lane.b32.xlu0 %v1250, 48
    %v1746 = vpop.permute.xlu0 %1745
    %1763 = vrot.lane.b32.xlu0 %v767, 64
    %v1764 = vpop.permute.xlu0 %1763
    %1765 = vrot.lane.b32.xlu0 %v768, 64
    %v1766 = vpop.permute.xlu0 %1765
    %1767 = vrot.lane.b32.xlu0 %v769, 64
    %v1768 = vpop.permute.xlu0 %1767
    %1769 = vrot.lane.b32.xlu0 %v770, 64
    %v1770 = vpop.permute.xlu0 %1769
    %1771 = vrot.lane.b32.xlu0 %v771, 64
    %v1772 = vpop.permute.xlu0 %1771
    %1773 = vrot.lane.b32.xlu0 %v772, 64
    %v1774 = vpop.permute.xlu0 %1773
    %1775 = vrot.lane.b32.xlu0 %v773, 64
    %v1776 = vpop.permute.xlu0 %1775
    %1777 = vrot.lane.b32.xlu0 %v774, 64
    %v1778 = vpop.permute.xlu0 %1777
    %1779 = vrot.lane.b32.xlu0 %v775, 64
    %v1780 = vpop.permute.xlu0 %1779
    %1781 = vrot.lane.b32.xlu0 %v776, 64
    %v1782 = vpop.permute.xlu0 %1781
    %1783 = vrot.lane.b32.xlu0 %v777, 64
    %v1784 = vpop.permute.xlu0 %1783
    %1785 = vrot.lane.b32.xlu0 %v778, 64
    %v1786 = vpop.permute.xlu0 %1785
    %1787 = vrot.lane.b32.xlu0 %v779, 64
    %v1788 = vpop.permute.xlu0 %1787
    %1789 = vrot.lane.b32.xlu0 %v780, 64
    %v1790 = vpop.permute.xlu0 %1789
    %1791 = vrot.lane.b32.xlu0 %v781, 64
    %v1792 = vpop.permute.xlu0 %1791
    %1793 = vrot.lane.b32.xlu0 %v782, 64
    %v1794 = vpop.permute.xlu0 %1793
    %1827 = vrot.lane.b32.xlu0 %v1315, 80
    %v1828 = vpop.permute.xlu0 %1827
    %1829 = vrot.lane.b32.xlu0 %v1316, 80
    %v1830 = vpop.permute.xlu0 %1829
    %1831 = vrot.lane.b32.xlu0 %v1317, 80
    %v1832 = vpop.permute.xlu0 %1831
    %1833 = vrot.lane.b32.xlu0 %v1318, 80
    %v1834 = vpop.permute.xlu0 %1833
    %1835 = vrot.lane.b32.xlu0 %v1319, 80
    %v1836 = vpop.permute.xlu0 %1835
    %1837 = vrot.lane.b32.xlu0 %v1320, 80
    %v1838 = vpop.permute.xlu0 %1837
    %1839 = vrot.lane.b32.xlu0 %v1321, 80
    %v1840 = vpop.permute.xlu0 %1839
    %1841 = vrot.lane.b32.xlu0 %v1322, 80
    %v1842 = vpop.permute.xlu0 %1841
    %1843 = vrot.lane.b32.xlu0 %v1323, 80
    %v1844 = vpop.permute.xlu0 %1843
    %1845 = vrot.lane.b32.xlu0 %v1324, 80
    %v1846 = vpop.permute.xlu0 %1845
    %1847 = vrot.lane.b32.xlu0 %v1325, 80
    %v1848 = vpop.permute.xlu0 %1847
    %1849 = vrot.lane.b32.xlu0 %v1326, 80
    %v1850 = vpop.permute.xlu0 %1849
    %1851 = vrot.lane.b32.xlu0 %v1327, 80
    %v1852 = vpop.permute.xlu0 %1851
    %1853 = vrot.lane.b32.xlu0 %v1328, 80
    %v1854 = vpop.permute.xlu0 %1853
    %1855 = vrot.lane.b32.xlu0 %v1329, 80
    %v1856 = vpop.permute.xlu0 %1855
    %1857 = vrot.lane.b32.xlu0 %v1330, 80
    %v1858 = vpop.permute.xlu0 %1857
    %1891 = vrot.lane.b32.xlu0 %v1395, 96
    %v1892 = vpop.permute.xlu0 %1891
    %1893 = vrot.lane.b32.xlu0 %v1396, 96
    %v1894 = vpop.permute.xlu0 %1893
    %1895 = vrot.lane.b32.xlu0 %v1397, 96
    %v1896 = vpop.permute.xlu0 %1895
    %1897 = vrot.lane.b32.xlu0 %v1398, 96
    %v1898 = vpop.permute.xlu0 %1897
    %1899 = vrot.lane.b32.xlu0 %v1399, 96
    %v1900 = vpop.permute.xlu0 %1899
    %1901 = vrot.lane.b32.xlu0 %v1400, 96
    %v1902 = vpop.permute.xlu0 %1901
    %1903 = vrot.lane.b32.xlu0 %v1401, 96
    %v1904 = vpop.permute.xlu0 %1903
    %1905 = vrot.lane.b32.xlu0 %v1402, 96
    %v1906 = vpop.permute.xlu0 %1905
    %1907 = vrot.lane.b32.xlu0 %v1403, 96
    %v1908 = vpop.permute.xlu0 %1907
    %1909 = vrot.lane.b32.xlu0 %v1404, 96
    %v1910 = vpop.permute.xlu0 %1909
    %1911 = vrot.lane.b32.xlu0 %v1405, 96
    %v1912 = vpop.permute.xlu0 %1911
    %1913 = vrot.lane.b32.xlu0 %v1406, 96
    %v1914 = vpop.permute.xlu0 %1913
    %1915 = vrot.lane.b32.xlu0 %v1407, 96
    %v1916 = vpop.permute.xlu0 %1915
    %1917 = vrot.lane.b32.xlu0 %v1408, 96
    %v1918 = vpop.permute.xlu0 %1917
    %1919 = vrot.lane.b32.xlu0 %v1409, 96
    %v1920 = vpop.permute.xlu0 %1919
    %1921 = vrot.lane.b32.xlu0 %v1410, 96
    %v1922 = vpop.permute.xlu0 %1921
    %1955 = vrot.lane.b32.xlu0 %v1475, 112
    %v1956 = vpop.permute.xlu0 %1955
    %1957 = vrot.lane.b32.xlu0 %v1476, 112
    %v1958 = vpop.permute.xlu0 %1957
    %1959 = vrot.lane.b32.xlu0 %v1477, 112
    %v1960 = vpop.permute.xlu0 %1959
    %1961 = vrot.lane.b32.xlu0 %v1478, 112
    %v1962 = vpop.permute.xlu0 %1961
    %1963 = vrot.lane.b32.xlu0 %v1479, 112
    %v1964 = vpop.permute.xlu0 %1963
    %1965 = vrot.lane.b32.xlu0 %v1480, 112
    %v1966 = vpop.permute.xlu0 %1965
    %1967 = vrot.lane.b32.xlu0 %v1481, 112
    %v1968 = vpop.permute.xlu0 %1967
    %1969 = vrot.lane.b32.xlu0 %v1482, 112
    %v1970 = vpop.permute.xlu0 %1969
    %1971 = vrot.lane.b32.xlu0 %v1483, 112
    %v1972 = vpop.permute.xlu0 %1971
    %1973 = vrot.lane.b32.xlu0 %v1484, 112
    %v1974 = vpop.permute.xlu0 %1973
    %1975 = vrot.lane.b32.xlu0 %v1485, 112
    %v1976 = vpop.permute.xlu0 %1975
    %1977 = vrot.lane.b32.xlu0 %v1486, 112
    %v1978 = vpop.permute.xlu0 %1977
    %1979 = vrot.lane.b32.xlu0 %v1487, 112
    %v1980 = vpop.permute.xlu0 %1979
    %1981 = vrot.lane.b32.xlu0 %v1488, 112
    %v1982 = vpop.permute.xlu0 %1981
    %1983 = vrot.lane.b32.xlu0 %v1489, 112
    %v1984 = vpop.permute.xlu0 %1983
    %1985 = vrot.lane.b32.xlu0 %v1490, 112
    %v1986 = vpop.permute.xlu0 %1985
    %vm2003 = vcmask 130048
    %v2004 = vsel %vm2003, %v945, %v1588
    %v2005 = vsel %vm2003, %v946, %v1590
    %v2006 = vsel %vm2003, %v947, %v1592
    %v2007 = vsel %vm2003, %v948, %v1594
    %v2008 = vsel %vm2003, %v949, %v1596
    %v2009 = vsel %vm2003, %v950, %v1598
    %v2010 = vsel %vm2003, %v951, %v1600
    %v2011 = vsel %vm2003, %v952, %v1602
    %v2012 = vsel %vm2003, %v953, %v1604
    %v2013 = vsel %vm2003, %v954, %v1606
    %v2014 = vsel %vm2003, %v955, %v1608
    %v2015 = vsel %vm2003, %v956, %v1610
    %v2016 = vsel %vm2003, %v957, %v1612
    %v2017 = vsel %vm2003, %v958, %v1614
    %v2018 = vsel %vm2003, %v959, %v1616
    %v2019 = vsel %vm2003, %v960, %v1618
    %vm2020 = vcmask 261120
    %v2021 = vsel %vm2020, %v2004, %v1652
    %v2022 = vsel %vm2020, %v2005, %v1654
    %v2023 = vsel %vm2020, %v2006, %v1656
    %v2024 = vsel %vm2020, %v2007, %v1658
    %v2025 = vsel %vm2020, %v2008, %v1660
    %v2026 = vsel %vm2020, %v2009, %v1662
    %v2027 = vsel %vm2020, %v2010, %v1664
    %v2028 = vsel %vm2020, %v2011, %v1666
    %v2029 = vsel %vm2020, %v2012, %v1668
    %v2030 = vsel %vm2020, %v2013, %v1670
    %v2031 = vsel %vm2020, %v2014, %v1672
    %v2032 = vsel %vm2020, %v2015, %v1674
    %v2033 = vsel %vm2020, %v2016, %v1676
    %v2034 = vsel %vm2020, %v2017, %v1678
    %v2035 = vsel %vm2020, %v2018, %v1680
    %v2036 = vsel %vm2020, %v2019, %v1682
    %vm2037 = vcmask 392192
    %v2038 = vsel %vm2037, %v2021, %v1716
    %v2039 = vsel %vm2037, %v2022, %v1718
    %v2040 = vsel %vm2037, %v2023, %v1720
    %v2041 = vsel %vm2037, %v2024, %v1722
    %v2042 = vsel %vm2037, %v2025, %v1724
    %v2043 = vsel %vm2037, %v2026, %v1726
    %v2044 = vsel %vm2037, %v2027, %v1728
    %v2045 = vsel %vm2037, %v2028, %v1730
    %v2046 = vsel %vm2037, %v2029, %v1732
    %v2047 = vsel %vm2037, %v2030, %v1734
    %v2048 = vsel %vm2037, %v2031, %v1736
    %v2049 = vsel %vm2037, %v2032, %v1738
    %v2050 = vsel %vm2037, %v2033, %v1740
    %v2051 = vsel %vm2037, %v2034, %v1742
    %v2052 = vsel %vm2037, %v2035, %v1744
    %v2053 = vsel %vm2037, %v2036, %v1746
    %vm2054 = vcmask 523264
    %v2055 = vsel %vm2054, %v2038, %v1764
    %v2056 = vsel %vm2054, %v2039, %v1766
    %v2057 = vsel %vm2054, %v2040, %v1768
    %v2058 = vsel %vm2054, %v2041, %v1770
    %v2059 = vsel %vm2054, %v2042, %v1772
    %v2060 = vsel %vm2054, %v2043, %v1774
    %v2061 = vsel %vm2054, %v2044, %v1776
    %v2062 = vsel %vm2054, %v2045, %v1778
    %v2063 = vsel %vm2054, %v2046, %v1780
    %v2064 = vsel %vm2054, %v2047, %v1782
    %v2065 = vsel %vm2054, %v2048, %v1784
    %v2066 = vsel %vm2054, %v2049, %v1786
    %v2067 = vsel %vm2054, %v2050, %v1788
    %v2068 = vsel %vm2054, %v2051, %v1790
    %v2069 = vsel %vm2054, %v2052, %v1792
    %v2070 = vsel %vm2054, %v2053, %v1794
    %vm2071 = vcmask 654336
    %v2072 = vsel %vm2071, %v2055, %v1828
    %v2073 = vsel %vm2071, %v2056, %v1830
    %v2074 = vsel %vm2071, %v2057, %v1832
    %v2075 = vsel %vm2071, %v2058, %v1834
    %v2076 = vsel %vm2071, %v2059, %v1836
    %v2077 = vsel %vm2071, %v2060, %v1838
    %v2078 = vsel %vm2071, %v2061, %v1840
    %v2079 = vsel %vm2071, %v2062, %v1842
    %v2080 = vsel %vm2071, %v2063, %v1844
    %v2081 = vsel %vm2071, %v2064, %v1846
    %v2082 = vsel %vm2071, %v2065, %v1848
    %v2083 = vsel %vm2071, %v2066, %v1850
    %v2084 = vsel %vm2071, %v2067, %v1852
    %v2085 = vsel %vm2071, %v2068, %v1854
    %v2086 = vsel %vm2071, %v2069, %v1856
    %v2087 = vsel %vm2071, %v2070, %v1858
    %vm2088 = vcmask 785408
    %v2089 = vsel %vm2088, %v2072, %v1892
    %v2090 = vsel %vm2088, %v2073, %v1894
    %v2091 = vsel %vm2088, %v2074, %v1896
    %v2092 = vsel %vm2088, %v2075, %v1898
    %v2093 = vsel %vm2088, %v2076, %v1900
    %v2094 = vsel %vm2088, %v2077, %v1902
    %v2095 = vsel %vm2088, %v2078, %v1904
    %v2096 = vsel %vm2088, %v2079, %v1906
    %v2097 = vsel %vm2088, %v2080, %v1908
    %v2098 = vsel %vm2088, %v2081, %v1910
    %v2099 = vsel %vm2088, %v2082, %v1912
    %v2100 = vsel %vm2088, %v2083, %v1914
    %v2101 = vsel %vm2088, %v2084, %v1916
    %v2102 = vsel %vm2088, %v2085, %v1918
    %v2103 = vsel %vm2088, %v2086, %v1920
    %v2104 = vsel %vm2088, %v2087, %v1922
    %vm2105 = vcmask 916480
    %v2106 = vsel %vm2105, %v2089, %v1956
    %v2107 = vsel %vm2105, %v2090, %v1958
    %v2108 = vsel %vm2105, %v2091, %v1960
    %v2109 = vsel %vm2105, %v2092, %v1962
    %v2110 = vsel %vm2105, %v2093, %v1964
    %v2111 = vsel %vm2105, %v2094, %v1966
    %v2112 = vsel %vm2105, %v2095, %v1968
    %v2113 = vsel %vm2105, %v2096, %v1970
    %v2114 = vsel %vm2105, %v2097, %v1972
    %v2115 = vsel %vm2105, %v2098, %v1974
    %v2116 = vsel %vm2105, %v2099, %v1976
    %v2117 = vsel %vm2105, %v2100, %v1978
    %v2118 = vsel %vm2105, %v2101, %v1980
    %v2119 = vsel %vm2105, %v2102, %v1982
    %v2120 = vsel %vm2105, %v2103, %v1984
    %v2121 = vsel %vm2105, %v2104, %v1986
    %v2122 = vpack.c.bf16 %v2107, %v2106
    %v2123 = vpack.c.bf16 %v1556, %v1555
    %v2124 = vpack.c.bf16 %v2109, %v2108
    %v2125 = vpack.c.bf16 %v1558, %v1557
    %v2126 = vpack.c.bf16 %v2111, %v2110
    %v2127 = vpack.c.bf16 %v1560, %v1559
    %v2128 = vpack.c.bf16 %v2113, %v2112
    %v2129 = vpack.c.bf16 %v1562, %v1561
    %v2130 = vpack.c.bf16 %v2115, %v2114
    %v2131 = vpack.c.bf16 %v1564, %v1563
    %v2132 = vpack.c.bf16 %v2117, %v2116
    %v2133 = vpack.c.bf16 %v1566, %v1565
    %v2134 = vpack.c.bf16 %v2119, %v2118
    %v2135 = vpack.c.bf16 %v1568, %v1567
    %v2136 = vpack.c.bf16 %v2121, %v2120
    %v2137 = vpack.c.bf16 %v1570, %v1569
    %v2138 = vld [vmem:[%s5] sm:$0xf]
    %v2139 = vld [vmem:[%s5 + $0x4] sm:$0xf]
    %v2140 = vld [vmem:[%s5 + $0x8] sm:$0xf]
    %v2141 = vld [vmem:[%s5 + $0xc] sm:$0xf]
    %v2142 = vld [vmem:[%s5 + $0x10] sm:$0xf]
    %v2143 = vld [vmem:[%s5 + $0x14] sm:$0xf]
    %v2144 = vld [vmem:[%s5 + $0x18] sm:$0xf]
    %v2145 = vld [vmem:[%s5 + $0x1c] sm:$0xf]
    %v2146 = vld [vmem:[%s5 + $0x20] sm:$0xf]
    %v2147 = vld [vmem:[%s5 + $0x24] sm:$0xf]
    %v2148 = vld [vmem:[%s5 + $0x28] sm:$0xf]
    %v2149 = vld [vmem:[%s5 + $0x2c] sm:$0xf]
    %v2150 = vld [vmem:[%s5 + $0x30] sm:$0xf]
    %v2151 = vld [vmem:[%s5 + $0x34] sm:$0xf]
    %v2152 = vld [vmem:[%s5 + $0x38] sm:$0xf]
    %v2153 = vld [vmem:[%s5 + $0x3c] sm:$0xf]
    %v2154 = vld [vmem:[%s5 + $0x40] sm:$0xf]
    %v2155 = vld [vmem:[%s5 + $0x44] sm:$0xf]
    %v2156 = vld [vmem:[%s6] sm:$0x1]
    %v2158 = vlaneseq
    %v2159 = vshrl.u32 %v2158, 7
    %v2160 = vsub.s32 0, %v2159
    %v2161 = vrot.slane %v2156, %v2160
    %v2181 = vunpack.c.l.b16 %v2138
    %v2182 = vunpack.c.l.b16 %v2139
    %v2183 = vunpack.c.l.b16 %v2140
    %v2184 = vunpack.c.l.b16 %v2141
    %v2185 = vunpack.c.l.b16 %v2142
    %v2186 = vunpack.c.l.b16 %v2143
    %v2187 = vunpack.c.l.b16 %v2144
    %v2188 = vunpack.c.l.b16 %v2145
    %v2189 = vunpack.c.l.b16 %v2146
    %v2190 = vunpack.c.l.b16 %v2147
    %v2191 = vunpack.c.l.b16 %v2148
    %v2192 = vunpack.c.l.b16 %v2149
    %v2193 = vunpack.c.l.b16 %v2150
    %v2194 = vunpack.c.l.b16 %v2151
    %v2195 = vunpack.c.l.b16 %v2152
    %v2196 = vunpack.c.l.b16 %v2153
    %v2197 = vunpack.c.l.b16 %v2154
    %v2198 = vunpack.c.l.b16 %v2155
    %v2199 = vpack.c.b16 %v2182, %v2181
    %v2200 = vpack.c.b16 %v2184, %v2183
    %v2201 = vpack.c.b16 %v2186, %v2185
    %v2202 = vpack.c.b16 %v2188, %v2187
    %v2203 = vpack.c.b16 %v2190, %v2189
    %v2204 = vpack.c.b16 %v2192, %v2191
    %v2205 = vpack.c.b16 %v2194, %v2193
    %v2206 = vpack.c.b16 %v2196, %v2195
    %v2207 = vpack.c.b16 %v2198, %v2197
    %v2218 = vsel %vm2003, %v2123, 0
    %v2221 = vsel %vm2003, %v2125, 0
    %v2224 = vsel %vm2003, %v2127, 0
    %v2227 = vsel %vm2003, %v2129, 0
    %v2230 = vsel %vm2003, %v2131, 0
    %v2233 = vsel %vm2003, %v2133, 0
    %v2236 = vsel %vm2003, %v2135, 0
    %v2239 = vsel %vm2003, %v2137, 0
    %2241 = vmatprep.subr.bf16.mxu0 0
    %2242 = vmatpush1.bf16.msra.mxu0 %v2199
    %2243 = vmatprep.subr.bf16.mxu0 0
    %2244 = vmatpush1.bf16.msra.mxu0 %v2200
    %2245 = vmatprep.subr.bf16.mxu0 0
    %2246 = vmatpush1.bf16.msra.mxu0 %v2201
    %2247 = vmatprep.subr.bf16.mxu0 0
    %2248 = vmatpush1.bf16.msra.mxu0 %v2202
    %2249 = vmatprep.subr.bf16.mxu0 0
    %2250 = vmatpush1.bf16.msra.mxu0 %v2203
    %2251 = vmatprep.subr.bf16.mxu0 0
    %2252 = vmatpush1.bf16.msra.mxu0 %v2204
    %2253 = vmatprep.subr.bf16.mxu0 0
    %2254 = vmatpush1.bf16.msra.mxu0 %v2205
    %2255 = vmatprep.subr.bf16.mxu0 0
    %2256 = vmatpush1.bf16.msra.mxu0 %v2206
    %2257 = vmatprep.subr.bf16.mxu0 0
    %2258 = vmatpush1.bf16.msra.mxu0 %v2207
    %2259 = vmatprep.subr.bf16.mxu0 0
    %2260 = vmatpush1.bf16.msra.mxu0 0
    %2261 = vmatprep.subr.bf16.mxu0 0
    %2262 = vmatpush1.bf16.msra.mxu0 0
    %2263 = vmatprep.subr.bf16.mxu0 0
    %2264 = vmatpush1.bf16.msra.mxu0 0
    %2265 = vmatprep.subr.bf16.mxu0 0
    %2266 = vmatpush1.bf16.msra.mxu0 0
    %2267 = vmatprep.subr.bf16.mxu0 0
    %2268 = vmatpush1.bf16.msra.mxu0 0
    %2269 = vmatprep.subr.bf16.mxu0 0
    %2270 = vmatpush1.bf16.msra.mxu0 0
    %2271 = vmatprep.subr.bf16.mxu0 0
    %2272 = vmatpush1.bf16.msra.mxu0 0
    %2273 = vmatprep.mubr.bf16.mxu0 %v2218
    %2274 = vmatmul.mubr.bf16.gmra.mrb[0].mxu0 %v2122
    %v2275 = vpop.f32.mrb[0].mxu0
    %v2276 = vadd.f32 %v2161, %v2275
    %v2277 = vpop.f32.mrb[0].mxu0
    %v2278 = vpop.f32.mrb[0].mxu0
    %v2279 = vadd.f32 %v2161, %v2278
    %v2280 = vpop.f32.mrb[0].mxu0
    %2281 = vmatprep.mubr.bf16.mxu0 %v2221
    %2282 = vmatmul.mubr.bf16.gmra.mrb[0].mxu0 %v2124
    %v2283 = vpop.f32.mrb[0].mxu0
    %v2284 = vadd.f32 %v2161, %v2283
    %v2285 = vpop.f32.mrb[0].mxu0
    %v2286 = vpop.f32.mrb[0].mxu0
    %v2287 = vadd.f32 %v2161, %v2286
    %v2288 = vpop.f32.mrb[0].mxu0
    %2289 = vmatprep.mubr.bf16.mxu0 %v2224
    %2290 = vmatmul.mubr.bf16.gmra.mrb[0].mxu0 %v2126
    %v2291 = vpop.f32.mrb[0].mxu0
    %v2292 = vadd.f32 %v2161, %v2291
    %v2293 = vpop.f32.mrb[0].mxu0
    %v2294 = vpop.f32.mrb[0].mxu0
    %v2295 = vadd.f32 %v2161, %v2294
    %v2296 = vpop.f32.mrb[0].mxu0
    %2297 = vmatprep.mubr.bf16.mxu0 %v2227
    %2298 = vmatmul.mubr.bf16.gmra.mrb[0].mxu0 %v2128
    %v2299 = vpop.f32.mrb[0].mxu0
    %v2300 = vadd.f32 %v2161, %v2299
    %v2301 = vpop.f32.mrb[0].mxu0
    %v2302 = vpop.f32.mrb[0].mxu0
    %v2303 = vadd.f32 %v2161, %v2302
    %v2304 = vpop.f32.mrb[0].mxu0
    %2305 = vmatprep.mubr.bf16.mxu0 %v2230
    %2306 = vmatmul.mubr.bf16.gmra.mrb[0].mxu0 %v2130
    %v2307 = vpop.f32.mrb[0].mxu0
    %v2308 = vadd.f32 %v2161, %v2307
    %v2309 = vpop.f32.mrb[0].mxu0
    %v2310 = vpop.f32.mrb[0].mxu0
    %v2311 = vadd.f32 %v2161, %v2310
    %v2312 = vpop.f32.mrb[0].mxu0
    %2313 = vmatprep.mubr.bf16.mxu0 %v2233
    %2314 = vmatmul.mubr.bf16.gmra.mrb[0].mxu0 %v2132
    %v2315 = vpop.f32.mrb[0].mxu0
    %v2316 = vadd.f32 %v2161, %v2315
    %v2317 = vpop.f32.mrb[0].mxu0
    %v2318 = vpop.f32.mrb[0].mxu0
    %v2319 = vadd.f32 %v2161, %v2318
    %v2320 = vpop.f32.mrb[0].mxu0
    %2321 = vmatprep.mubr.bf16.mxu0 %v2236
    %2322 = vmatmul.mubr.bf16.gmra.mrb[0].mxu0 %v2134
    %v2323 = vpop.f32.mrb[0].mxu0
    %v2324 = vadd.f32 %v2161, %v2323
    %v2325 = vpop.f32.mrb[0].mxu0
    %v2326 = vpop.f32.mrb[0].mxu0
    %v2327 = vadd.f32 %v2161, %v2326
    %v2328 = vpop.f32.mrb[0].mxu0
    %2329 = vmatprep.mubr.bf16.mxu0 %v2239
    %2330 = vmatmul.mubr.bf16.gmra.mrb[0].mxu0 %v2136
    %v2331 = vpop.f32.mrb[0].mxu0
    %v2332 = vadd.f32 %v2161, %v2331
    %v2333 = vpop.f32.mrb[0].mxu0
    %v2334 = vpop.f32.mrb[0].mxu0
    %v2335 = vadd.f32 %v2161, %v2334
    %v2336 = vpop.f32.mrb[0].mxu0
    %2337 = vdwg.mxu0
    %v2338 = vmax.f32 %v2276, 0.0
    %v2339 = vmax.f32 %v2279, 0.0
    %v2340 = vmax.f32 %v2284, 0.0
    %v2341 = vmax.f32 %v2287, 0.0
    %v2342 = vmax.f32 %v2292, 0.0
    %v2343 = vmax.f32 %v2295, 0.0
    %v2344 = vmax.f32 %v2300, 0.0
    %v2345 = vmax.f32 %v2303, 0.0
    %v2346 = vmax.f32 %v2308, 0.0
    %v2347 = vmax.f32 %v2311, 0.0
    %v2348 = vmax.f32 %v2316, 0.0
    %v2349 = vmax.f32 %v2319, 0.0
    %v2350 = vmax.f32 %v2324, 0.0
    %v2351 = vmax.f32 %v2327, 0.0
    %v2352 = vmax.f32 %v2332, 0.0
    %v2353 = vmax.f32 %v2335, 0.0
    %v2354 = vmax.f32 %v2338, %v2339
    %v2355 = vmax.f32 %v2339, %v2340
    %v2356 = vmax.f32 %v2340, %v2341
    %v2357 = vmax.f32 %v2341, %v2342
    %v2358 = vmax.f32 %v2342, %v2343
    %v2359 = vmax.f32 %v2343, %v2344
    %v2360 = vmax.f32 %v2344, %v2345
    %v2361 = vmax.f32 %v2345, %v2346
    %v2362 = vmax.f32 %v2346, %v2347
    %v2363 = vmax.f32 %v2347, %v2348
    %v2364 = vmax.f32 %v2348, %v2349
    %v2365 = vmax.f32 %v2349, %v2350
    %v2366 = vmax.f32 %v2350, %v2351
    %v2367 = vmax.f32 %v2351, %v2352
    %v2368 = vmax.f32 %v2352, %v2353
    %v2369 = vmax.f32 %v2353, %v2338
    %v2386 = vrot.slane %v2354, 1
    %v2387 = vrot.slane %v2355, 1
    %v2388 = vsel %vm1043, %v2386, %v2387
    %v2389 = vrot.slane %v2356, 1
    %v2390 = vsel %vm1043, %v2387, %v2389
    %v2391 = vrot.slane %v2357, 1
    %v2392 = vsel %vm1043, %v2389, %v2391
    %v2393 = vrot.slane %v2358, 1
    %v2394 = vsel %vm1043, %v2391, %v2393
    %v2395 = vrot.slane %v2359, 1
    %v2396 = vsel %vm1043, %v2393, %v2395
    %v2397 = vrot.slane %v2360, 1
    %v2398 = vsel %vm1043, %v2395, %v2397
    %v2399 = vrot.slane %v2361, 1
    %v2400 = vsel %vm1043, %v2397, %v2399
    %v2401 = vrot.slane %v2362, 1
    %v2402 = vsel %vm1043, %v2399, %v2401
    %v2403 = vrot.slane %v2363, 1
    %v2404 = vsel %vm1043, %v2401, %v2403
    %v2405 = vrot.slane %v2364, 1
    %v2406 = vsel %vm1043, %v2403, %v2405
    %v2407 = vrot.slane %v2365, 1
    %v2408 = vsel %vm1043, %v2405, %v2407
    %v2409 = vrot.slane %v2366, 1
    %v2410 = vsel %vm1043, %v2407, %v2409
    %v2411 = vrot.slane %v2367, 1
    %v2412 = vsel %vm1043, %v2409, %v2411
    %v2413 = vrot.slane %v2368, 1
    %v2414 = vsel %vm1043, %v2411, %v2413
    %v2415 = vrot.slane %v2369, 1
    %v2416 = vsel %vm1043, %v2413, %v2415
    %v2434 = vsel %vm1043, %v2415, %v2386
    %v2435 = vmax.f32 %v2354, %v2388
    %v2436 = vmax.f32 %v2355, %v2390
    %v2437 = vmax.f32 %v2356, %v2392
    %v2438 = vmax.f32 %v2357, %v2394
    %v2439 = vmax.f32 %v2358, %v2396
    %v2440 = vmax.f32 %v2359, %v2398
    %v2441 = vmax.f32 %v2360, %v2400
    %v2442 = vmax.f32 %v2361, %v2402
    %v2443 = vmax.f32 %v2362, %v2404
    %v2444 = vmax.f32 %v2363, %v2406
    %v2445 = vmax.f32 %v2364, %v2408
    %v2446 = vmax.f32 %v2365, %v2410
    %v2447 = vmax.f32 %v2366, %v2412
    %v2448 = vmax.f32 %v2367, %v2414
    %v2449 = vmax.f32 %v2368, %v2416
    %v2450 = vmax.f32 %v2369, %v2434
    %v2451 = vld [vmem:[%s2] sm:$0xff]
    %v2452 = vld [vmem:[%s2 + $0x8] sm:$0xff]
    %v2453 = vld [vmem:[%s2 + $0x10] sm:$0xff]
    %v2454 = vld [vmem:[%s2 + $0x18] sm:$0xff]
    %2455 = vmatprep.subr.mxu0 0.0
    %2456 = vmatpush1.msra.mxu0 %v2435
    %2457 = vmatprep.subr.mxu0 0.0
    %2458 = vmatpush1.msra.mxu0 %v2436
    %2459 = vmatprep.subr.mxu0 0.0
    %2460 = vmatpush1.msra.mxu0 %v2437
    %2461 = vmatprep.subr.mxu0 0.0
    %2462 = vmatpush1.msra.mxu0 %v2438
    %2463 = vmatprep.subr.mxu0 0.0
    %2464 = vmatpush1.msra.mxu0 %v2439
    %2465 = vmatprep.subr.mxu0 0.0
    %2466 = vmatpush1.msra.mxu0 %v2440
    %2467 = vmatprep.subr.mxu0 0.0
    %2468 = vmatpush1.msra.mxu0 %v2441
    %2469 = vmatprep.subr.mxu0 0.0
    %2470 = vmatpush1.msra.mxu0 %v2442
    %2471 = vmatprep.subr.mxu0 0.0
    %2472 = vmatpush1.msra.mxu0 %v2443
    %2473 = vmatprep.subr.mxu0 0.0
    %2474 = vmatpush1.msra.mxu0 %v2444
    %2475 = vmatprep.subr.mxu0 0.0
    %2476 = vmatpush1.msra.mxu0 %v2445
    %2477 = vmatprep.subr.mxu0 0.0
    %2478 = vmatpush1.msra.mxu0 %v2446
    %2479 = vmatprep.subr.mxu0 0.0
    %2480 = vmatpush1.msra.mxu0 %v2447
    %2481 = vmatprep.subr.mxu0 0.0
    %2482 = vmatpush1.msra.mxu0 %v2448
    %2483 = vmatprep.subr.mxu0 0.0
    %2484 = vmatpush1.msra.mxu0 %v2449
    %2485 = vmatprep.subr.mxu0 0.0
    %2486 = vmatpush1.msra.mxu0 %v2450
    %2487 = vmatprep.subr.mxu0 0.0
    %2488 = vmatpush1.msra.mxu0 0.0
    %2489 = vmatprep.subr.mxu0 0.0
    %2490 = vmatpush1.msra.mxu0 0.0
    %2491 = vmatprep.subr.mxu0 0.0
    %2492 = vmatpush1.msra.mxu0 0.0
    %2493 = vmatprep.subr.mxu0 0.0
    %2494 = vmatpush1.msra.mxu0 0.0
    %2495 = vmatprep.subr.mxu0 0.0
    %2496 = vmatpush1.msra.mxu0 0.0
    %2497 = vmatprep.subr.mxu0 0.0
    %2498 = vmatpush1.msra.mxu0 0.0
    %2499 = vmatprep.subr.mxu0 0.0
    %2500 = vmatpush1.msra.mxu0 0.0
    %2501 = vmatprep.subr.mxu0 0.0
    %2502 = vmatpush1.msra.mxu0 0.0
    %2503 = vmatprep.subr.mxu0 0.0
    %2504 = vmatpush1.msra.mxu0 0.0
    %2505 = vmatprep.subr.mxu0 0.0
    %2506 = vmatpush1.msra.mxu0 0.0
    %2507 = vmatprep.subr.mxu0 0.0
    %2508 = vmatpush1.msra.mxu0 0.0
    %2509 = vmatprep.subr.mxu0 0.0
    %2510 = vmatpush1.msra.mxu0 0.0
    %2511 = vmatprep.subr.mxu0 0.0
    %2512 = vmatpush1.msra.mxu0 0.0
    %2513 = vmatprep.subr.mxu0 0.0
    %2514 = vmatpush1.msra.mxu0 0.0
    %2515 = vmatprep.subr.mxu0 0.0
    %2516 = vmatpush1.msra.mxu0 0.0
    %2517 = vmatprep.subr.mxu0 0.0
    %2518 = vmatpush1.msra.mxu0 0.0
    %2519 = vmatprep.mubr.f32.mxu0 0.0
    %2520 = vmatmul.mubr.f32.gmra.mrb[0].mxu0 %v2451
    %v2521 = vpop.f32.mrb[0].mxu0
    %v2522 = vadd.f32 0.0, %v2521
    %v2523 = vpop.f32.mrb[0].mxu0
    %2524 = vmatprep.mubr.f32.mxu0 0.0
    %2525 = vmatmul.mubr.f32.gmra.mrb[0].mxu0 %v2452
    %v2526 = vpop.f32.mrb[0].mxu0
    %v2527 = vadd.f32 0.0, %v2526
    %v2528 = vpop.f32.mrb[0].mxu0
    %2529 = vmatprep.mubr.f32.mxu0 0.0
    %2530 = vmatmul.mubr.f32.gmra.mrb[0].mxu0 %v2453
    %v2531 = vpop.f32.mrb[0].mxu0
    %v2532 = vadd.f32 0.0, %v2531
    %v2533 = vpop.f32.mrb[0].mxu0
    %2534 = vmatprep.mubr.f32.mxu0 0.0
    %2535 = vmatmul.mubr.f32.gmra.mrb[0].mxu0 %v2454
    %v2536 = vpop.f32.mrb[0].mxu0
    %v2537 = vadd.f32 0.0, %v2536
    %v2538 = vpop.f32.mrb[0].mxu0
    %2539 = vdwg.mxu0
    %v2541 = vrot.slane %v2522, 2
    %2542 = vrot.lane.b32.xlu0 %v2541, 32
    %v2543 = vpop.permute.xlu0 %2542
    %v2545 = vrot.slane %v2522, 4
    %2546 = vrot.lane.b32.xlu0 %v2545, 64
    %v2547 = vpop.permute.xlu0 %2546
    %v2549 = vrot.slane %v2522, 6
    %2550 = vrot.lane.b32.xlu0 %v2549, 96
    %v2551 = vpop.permute.xlu0 %2550
    %v2554 = vrot.slane %v2527, 2
    %2555 = vrot.lane.b32.xlu0 %v2554, 32
    %v2556 = vpop.permute.xlu0 %2555
    %v2558 = vrot.slane %v2527, 4
    %2559 = vrot.lane.b32.xlu0 %v2558, 64
    %v2560 = vpop.permute.xlu0 %2559
    %v2562 = vrot.slane %v2527, 6
    %2563 = vrot.lane.b32.xlu0 %v2562, 96
    %v2564 = vpop.permute.xlu0 %2563
    %v2567 = vrot.slane %v2532, 2
    %2568 = vrot.lane.b32.xlu0 %v2567, 32
    %v2569 = vpop.permute.xlu0 %2568
    %v2571 = vrot.slane %v2532, 4
    %2572 = vrot.lane.b32.xlu0 %v2571, 64
    %v2573 = vpop.permute.xlu0 %2572
    %v2575 = vrot.slane %v2532, 6
    %2576 = vrot.lane.b32.xlu0 %v2575, 96
    %v2577 = vpop.permute.xlu0 %2576
    %v2580 = vrot.slane %v2537, 2
    %2581 = vrot.lane.b32.xlu0 %v2580, 32
    %v2582 = vpop.permute.xlu0 %2581
    %v2584 = vrot.slane %v2537, 4
    %2585 = vrot.lane.b32.xlu0 %v2584, 64
    %v2586 = vpop.permute.xlu0 %2585
    %v2588 = vrot.slane %v2537, 6
    %2589 = vrot.lane.b32.xlu0 %v2588, 96
    %v2590 = vpop.permute.xlu0 %2589
    %v2592 = vsel %vm2020, %v2522, %v2543
    %v2593 = vsel %vm2054, %v2592, %v2547
    %v2594 = vsel %vm2088, %v2593, %v2551
    %v2595 = vsel %vm2020, %v2527, %v2556
    %v2596 = vsel %vm2054, %v2595, %v2560
    %v2597 = vsel %vm2088, %v2596, %v2564
    %v2598 = vsel %vm2020, %v2532, %v2569
    %v2599 = vsel %vm2054, %v2598, %v2573
    %v2600 = vsel %vm2088, %v2599, %v2577
    %v2601 = vsel %vm2020, %v2537, %v2582
    %v2602 = vsel %vm2054, %v2601, %v2586
    %v2603 = vsel %vm2088, %v2602, %v2590
    %v2604 = vpack.c.bf16 %v2594, %v2594
    %v2605 = vpack.c.bf16 %v2597, %v2597
    %v2606 = vpack.c.bf16 %v2600, %v2600
    %v2607 = vpack.c.bf16 %v2603, %v2603
    %v2608 = vld [vmem:[%s7] sm:$0xf]
    %v2609 = vld [vmem:[%s7 + $0x4] sm:$0xf]
    %v2610 = vld [vmem:[%s7 + $0x8] sm:$0xf]
    %v2611 = vld [vmem:[%s7 + $0xc] sm:$0xf]
    %v2612 = vld [vmem:[%s7 + $0x10] sm:$0xf]
    %v2613 = vld [vmem:[%s7 + $0x14] sm:$0xf]
    %v2614 = vld [vmem:[%s7 + $0x18] sm:$0xf]
    %v2615 = vld [vmem:[%s7 + $0x1c] sm:$0xf]
    %v2616 = vld [vmem:[%s7 + $0x20] sm:$0xf]
    %v2617 = vld [vmem:[%s7 + $0x24] sm:$0xf]
    %v2618 = vld [vmem:[%s7 + $0x28] sm:$0xf]
    %v2619 = vld [vmem:[%s7 + $0x2c] sm:$0xf]
    %v2620 = vld [vmem:[%s7 + $0x30] sm:$0xf]
    %v2621 = vld [vmem:[%s7 + $0x34] sm:$0xf]
    %v2622 = vld [vmem:[%s7 + $0x38] sm:$0xf]
    %v2623 = vld [vmem:[%s7 + $0x3c] sm:$0xf]
    %v2624 = vld [vmem:[%s7 + $0x40] sm:$0xf]
    %v2625 = vld [vmem:[%s7 + $0x44] sm:$0xf]
    %v2626 = vld [vmem:[%s7 + $0x48] sm:$0xf]
    %v2627 = vld [vmem:[%s7 + $0x4c] sm:$0xf]
    %v2628 = vld [vmem:[%s7 + $0x50] sm:$0xf]
    %v2629 = vld [vmem:[%s7 + $0x54] sm:$0xf]
    %v2630 = vld [vmem:[%s7 + $0x58] sm:$0xf]
    %v2631 = vld [vmem:[%s7 + $0x5c] sm:$0xf]
    %v2632 = vld [vmem:[%s7 + $0x60] sm:$0xf]
    %v2633 = vld [vmem:[%s7 + $0x64] sm:$0xf]
    %v2634 = vld [vmem:[%s7 + $0x68] sm:$0xf]
    %v2635 = vld [vmem:[%s7 + $0x6c] sm:$0xf]
    %v2636 = vld [vmem:[%s7 + $0x70] sm:$0xf]
    %v2637 = vld [vmem:[%s7 + $0x74] sm:$0xf]
    %v2638 = vld [vmem:[%s7 + $0x78] sm:$0xf]
    %v2639 = vld [vmem:[%s7 + $0x7c] sm:$0xf]
    %v2640 = vld [vmem:[%s7 + $0x80] sm:$0xf]
    %v2641 = vld [vmem:[%s7 + $0x84] sm:$0xf]
    %v2642 = vld [vmem:[%s7 + $0x88] sm:$0xf]
    %v2643 = vld [vmem:[%s7 + $0x8c] sm:$0xf]
    %v2644 = vld [vmem:[%s7 + $0x90] sm:$0xf]
    %v2645 = vld [vmem:[%s7 + $0x94] sm:$0xf]
    %v2646 = vld [vmem:[%s7 + $0x98] sm:$0xf]
    %v2647 = vld [vmem:[%s7 + $0x9c] sm:$0xf]
    %v2648 = vld [vmem:[%s7 + $0xa0] sm:$0xf]
    %v2649 = vld [vmem:[%s7 + $0xa4] sm:$0xf]
    %v2650 = vld [vmem:[%s7 + $0xa8] sm:$0xf]
    %v2651 = vld [vmem:[%s7 + $0xac] sm:$0xf]
    %v2652 = vld [vmem:[%s7 + $0xb0] sm:$0xf]
    %v2653 = vld [vmem:[%s7 + $0xb4] sm:$0xf]
    %v2654 = vld [vmem:[%s7 + $0xb8] sm:$0xf]
    %v2655 = vld [vmem:[%s7 + $0xbc] sm:$0xf]
    %v2656 = vld [vmem:[%s7 + $0xc0] sm:$0xf]
    %v2657 = vld [vmem:[%s7 + $0xc4] sm:$0xf]
    %v2658 = vld [vmem:[%s7 + $0xc8] sm:$0xf]
    %v2659 = vld [vmem:[%s7 + $0xcc] sm:$0xf]
    %v2660 = vld [vmem:[%s7 + $0xd0] sm:$0xf]
    %v2661 = vld [vmem:[%s7 + $0xd4] sm:$0xf]
    %v2662 = vld [vmem:[%s7 + $0xd8] sm:$0xf]
    %v2663 = vld [vmem:[%s7 + $0xdc] sm:$0xf]
    %v2664 = vld [vmem:[%s7 + $0xe0] sm:$0xf]
    %v2665 = vld [vmem:[%s7 + $0xe4] sm:$0xf]
    %v2666 = vld [vmem:[%s7 + $0xe8] sm:$0xf]
    %v2667 = vld [vmem:[%s7 + $0xec] sm:$0xf]
    %v2668 = vld [vmem:[%s7 + $0xf0] sm:$0xf]
    %v2669 = vld [vmem:[%s7 + $0xf4] sm:$0xf]
    %v2670 = vld [vmem:[%s7 + $0xf8] sm:$0xf]
    %v2671 = vld [vmem:[%s7 + $0xfc] sm:$0xf]
    %v2672 = vld [vmem:[%s8] sm:$0x1]
    %v2674 = vlaneseq
    %v2675 = vshrl.u32 %v2674, 7
    %v2676 = vsub.s32 0, %v2675
    %v2677 = vrot.slane %v2672, %v2676
    %v2743 = vunpack.c.l.b16 %v2608
    %v2744 = vunpack.c.l.b16 %v2609
    %v2745 = vunpack.c.l.b16 %v2610
    %v2746 = vunpack.c.l.b16 %v2611
    %v2747 = vunpack.c.l.b16 %v2612
    %v2748 = vunpack.c.l.b16 %v2613
    %v2749 = vunpack.c.l.b16 %v2614
    %v2750 = vunpack.c.l.b16 %v2615
    %v2751 = vunpack.c.l.b16 %v2616
    %v2752 = vunpack.c.l.b16 %v2617
    %v2753 = vunpack.c.l.b16 %v2618
    %v2754 = vunpack.c.l.b16 %v2619
    %v2755 = vunpack.c.l.b16 %v2620
    %v2756 = vunpack.c.l.b16 %v2621
    %v2757 = vunpack.c.l.b16 %v2622
    %v2758 = vunpack.c.l.b16 %v2623
    %v2759 = vunpack.c.l.b16 %v2624
    %v2760 = vunpack.c.l.b16 %v2625
    %v2761 = vunpack.c.l.b16 %v2626
    %v2762 = vunpack.c.l.b16 %v2627
    %v2763 = vunpack.c.l.b16 %v2628
    %v2764 = vunpack.c.l.b16 %v2629
    %v2765 = vunpack.c.l.b16 %v2630
    %v2766 = vunpack.c.l.b16 %v2631
    %v2767 = vunpack.c.l.b16 %v2632
    %v2768 = vunpack.c.l.b16 %v2633
    %v2769 = vunpack.c.l.b16 %v2634
    %v2770 = vunpack.c.l.b16 %v2635
    %v2771 = vunpack.c.l.b16 %v2636
    %v2772 = vunpack.c.l.b16 %v2637
    %v2773 = vunpack.c.l.b16 %v2638
    %v2774 = vunpack.c.l.b16 %v2639
    %v2775 = vunpack.c.l.b16 %v2640
    %v2776 = vunpack.c.l.b16 %v2641
    %v2777 = vunpack.c.l.b16 %v2642
    %v2778 = vunpack.c.l.b16 %v2643
    %v2779 = vunpack.c.l.b16 %v2644
    %v2780 = vunpack.c.l.b16 %v2645
    %v2781 = vunpack.c.l.b16 %v2646
    %v2782 = vunpack.c.l.b16 %v2647
    %v2783 = vunpack.c.l.b16 %v2648
    %v2784 = vunpack.c.l.b16 %v2649
    %v2785 = vunpack.c.l.b16 %v2650
    %v2786 = vunpack.c.l.b16 %v2651
    %v2787 = vunpack.c.l.b16 %v2652
    %v2788 = vunpack.c.l.b16 %v2653
    %v2789 = vunpack.c.l.b16 %v2654
    %v2790 = vunpack.c.l.b16 %v2655
    %v2791 = vunpack.c.l.b16 %v2656
    %v2792 = vunpack.c.l.b16 %v2657
    %v2793 = vunpack.c.l.b16 %v2658
    %v2794 = vunpack.c.l.b16 %v2659
    %v2795 = vunpack.c.l.b16 %v2660
    %v2796 = vunpack.c.l.b16 %v2661
    %v2797 = vunpack.c.l.b16 %v2662
    %v2798 = vunpack.c.l.b16 %v2663
    %v2799 = vunpack.c.l.b16 %v2664
    %v2800 = vunpack.c.l.b16 %v2665
    %v2801 = vunpack.c.l.b16 %v2666
    %v2802 = vunpack.c.l.b16 %v2667
    %v2803 = vunpack.c.l.b16 %v2668
    %v2804 = vunpack.c.l.b16 %v2669
    %v2805 = vunpack.c.l.b16 %v2670
    %v2806 = vunpack.c.l.b16 %v2671
    %v2807 = vpack.c.b16 %v2744, %v2743
    %v2808 = vpack.c.b16 %v2746, %v2745
    %v2809 = vpack.c.b16 %v2748, %v2747
    %v2810 = vpack.c.b16 %v2750, %v2749
    %v2811 = vpack.c.b16 %v2752, %v2751
    %v2812 = vpack.c.b16 %v2754, %v2753
    %v2813 = vpack.c.b16 %v2756, %v2755
    %v2814 = vpack.c.b16 %v2758, %v2757
    %v2815 = vpack.c.b16 %v2760, %v2759
    %v2816 = vpack.c.b16 %v2762, %v2761
    %v2817 = vpack.c.b16 %v2764, %v2763
    %v2818 = vpack.c.b16 %v2766, %v2765
    %v2819 = vpack.c.b16 %v2768, %v2767
    %v2820 = vpack.c.b16 %v2770, %v2769
    %v2821 = vpack.c.b16 %v2772, %v2771
    %v2822 = vpack.c.b16 %v2774, %v2773
    %v2823 = vpack.c.b16 %v2776, %v2775
    %v2824 = vpack.c.b16 %v2778, %v2777
    %v2825 = vpack.c.b16 %v2780, %v2779
    %v2826 = vpack.c.b16 %v2782, %v2781
    %v2827 = vpack.c.b16 %v2784, %v2783
    %v2828 = vpack.c.b16 %v2786, %v2785
    %v2829 = vpack.c.b16 %v2788, %v2787
    %v2830 = vpack.c.b16 %v2790, %v2789
    %v2831 = vpack.c.b16 %v2792, %v2791
    %v2832 = vpack.c.b16 %v2794, %v2793
    %v2833 = vpack.c.b16 %v2796, %v2795
    %v2834 = vpack.c.b16 %v2798, %v2797
    %v2835 = vpack.c.b16 %v2800, %v2799
    %v2836 = vpack.c.b16 %v2802, %v2801
    %v2837 = vpack.c.b16 %v2804, %v2803
    %v2838 = vpack.c.b16 %v2806, %v2805
    %2871 = vmatprep.subr.bf16.mxu0 0
    %2872 = vmatpush1.bf16.msra.mxu0 %v2807
    %2873 = vmatprep.subr.bf16.mxu0 0
    %2874 = vmatpush1.bf16.msra.mxu0 %v2808
    %2875 = vmatprep.subr.bf16.mxu0 0
    %2876 = vmatpush1.bf16.msra.mxu0 %v2809
    %2877 = vmatprep.subr.bf16.mxu0 0
    %2878 = vmatpush1.bf16.msra.mxu0 %v2810
    %2879 = vmatprep.subr.bf16.mxu0 0
    %2880 = vmatpush1.bf16.msra.mxu0 %v2811
    %2881 = vmatprep.subr.bf16.mxu0 0
    %2882 = vmatpush1.bf16.msra.mxu0 %v2812
    %2883 = vmatprep.subr.bf16.mxu0 0
    %2884 = vmatpush1.bf16.msra.mxu0 %v2813
    %2885 = vmatprep.subr.bf16.mxu0 0
    %2886 = vmatpush1.bf16.msra.mxu0 %v2814
    %2887 = vmatprep.subr.bf16.mxu0 0
    %2888 = vmatpush1.bf16.msra.mxu0 %v2815
    %2889 = vmatprep.subr.bf16.mxu0 0
    %2890 = vmatpush1.bf16.msra.mxu0 %v2816
    %2891 = vmatprep.subr.bf16.mxu0 0
    %2892 = vmatpush1.bf16.msra.mxu0 %v2817
    %2893 = vmatprep.subr.bf16.mxu0 0
    %2894 = vmatpush1.bf16.msra.mxu0 %v2818
    %2895 = vmatprep.subr.bf16.mxu0 0
    %2896 = vmatpush1.bf16.msra.mxu0 %v2819
    %2897 = vmatprep.subr.bf16.mxu0 0
    %2898 = vmatpush1.bf16.msra.mxu0 %v2820
    %2899 = vmatprep.subr.bf16.mxu0 0
    %2900 = vmatpush1.bf16.msra.mxu0 %v2821
    %2901 = vmatprep.subr.bf16.mxu0 0
    %2902 = vmatpush1.bf16.msra.mxu0 %v2822
    %2903 = vmatprep.mubr.bf16.mxu0 %v2605
    %2904 = vmatmul.mubr.bf16.gmra.mrb[0].mxu0 %v2604
    %v2905 = vpop.f32.mrb[0].mxu0
    %v2906 = vadd.f32 %v2677, %v2905
    %v2907 = vpop.f32.mrb[0].mxu0
    %v2908 = vpop.f32.mrb[0].mxu0
    %v2909 = vpop.f32.mrb[0].mxu0
    %2910 = vdwg.mxu0
    %2911 = vmatprep.subr.bf16.mxu0 0
    %2912 = vmatpush1.bf16.msra.mxu0 %v2823
    %2913 = vmatprep.subr.bf16.mxu0 0
    %2914 = vmatpush1.bf16.msra.mxu0 %v2824
    %2915 = vmatprep.subr.bf16.mxu0 0
    %2916 = vmatpush1.bf16.msra.mxu0 %v2825
    %2917 = vmatprep.subr.bf16.mxu0 0
    %2918 = vmatpush1.bf16.msra.mxu0 %v2826
    %2919 = vmatprep.subr.bf16.mxu0 0
    %2920 = vmatpush1.bf16.msra.mxu0 %v2827
    %2921 = vmatprep.subr.bf16.mxu0 0
    %2922 = vmatpush1.bf16.msra.mxu0 %v2828
    %2923 = vmatprep.subr.bf16.mxu0 0
    %2924 = vmatpush1.bf16.msra.mxu0 %v2829
    %2925 = vmatprep.subr.bf16.mxu0 0
    %2926 = vmatpush1.bf16.msra.mxu0 %v2830
    %2927 = vmatprep.subr.bf16.mxu0 0
    %2928 = vmatpush1.bf16.msra.mxu0 %v2831
    %2929 = vmatprep.subr.bf16.mxu0 0
    %2930 = vmatpush1.bf16.msra.mxu0 %v2832
    %2931 = vmatprep.subr.bf16.mxu0 0
    %2932 = vmatpush1.bf16.msra.mxu0 %v2833
    %2933 = vmatprep.subr.bf16.mxu0 0
    %2934 = vmatpush1.bf16.msra.mxu0 %v2834
    %2935 = vmatprep.subr.bf16.mxu0 0
    %2936 = vmatpush1.bf16.msra.mxu0 %v2835
    %2937 = vmatprep.subr.bf16.mxu0 0
    %2938 = vmatpush1.bf16.msra.mxu0 %v2836
    %2939 = vmatprep.subr.bf16.mxu0 0
    %2940 = vmatpush1.bf16.msra.mxu0 %v2837
    %2941 = vmatprep.subr.bf16.mxu0 0
    %2942 = vmatpush1.bf16.msra.mxu0 %v2838
    %2943 = vmatprep.mubr.bf16.mxu0 %v2607
    %2944 = vmatmul.mubr.bf16.gmra.mrb[0].mxu0 %v2606
    %v2945 = vpop.f32.mrb[0].mxu0
    %v2946 = vadd.f32 %v2906, %v2945
    %v2947 = vpop.f32.mrb[0].mxu0
    %v2948 = vpop.f32.mrb[0].mxu0
    %v2949 = vpop.f32.mrb[0].mxu0
    %2950 = vdwg.mxu0
    %v2951 = vmax.f32 %v2946, 0.0
    %v2952 = vpack.c.bf16 %v2951, %v2951
    %v2953 = vld [vmem:[%s9] sm:$0xf]
    %v2954 = vld [vmem:[%s9 + $0x4] sm:$0xf]
    %v2955 = vld [vmem:[%s9 + $0x8] sm:$0xf]
    %v2956 = vld [vmem:[%s9 + $0xc] sm:$0xf]
    %v2957 = vld [vmem:[%s9 + $0x10] sm:$0xf]
    %v2958 = vld [vmem:[%s9 + $0x14] sm:$0xf]
    %v2959 = vld [vmem:[%s9 + $0x18] sm:$0xf]
    %v2960 = vld [vmem:[%s9 + $0x1c] sm:$0xf]
    %v2961 = vld [vmem:[%s9 + $0x20] sm:$0xf]
    %v2962 = vld [vmem:[%s9 + $0x24] sm:$0xf]
    %v2963 = vld [vmem:[%s9 + $0x28] sm:$0xf]
    %v2964 = vld [vmem:[%s9 + $0x2c] sm:$0xf]
    %v2965 = vld [vmem:[%s9 + $0x30] sm:$0xf]
    %v2966 = vld [vmem:[%s9 + $0x34] sm:$0xf]
    %v2967 = vld [vmem:[%s9 + $0x38] sm:$0xf]
    %v2968 = vld [vmem:[%s9 + $0x3c] sm:$0xf]
    %v2969 = vld [vmem:[%s10] sm:$0x1]
    %v2971 = vlaneseq
    %v2972 = vshrl.u32 %v2971, 7
    %v2973 = vsub.s32 0, %v2972
    %v2974 = vrot.slane %v2969, %v2973
    %v2992 = vunpack.c.l.b16 %v2953
    %v2993 = vunpack.c.l.b16 %v2954
    %v2994 = vunpack.c.l.b16 %v2955
    %v2995 = vunpack.c.l.b16 %v2956
    %v2996 = vunpack.c.l.b16 %v2957
    %v2997 = vunpack.c.l.b16 %v2958
    %v2998 = vunpack.c.l.b16 %v2959
    %v2999 = vunpack.c.l.b16 %v2960
    %v3000 = vunpack.c.l.b16 %v2961
    %v3001 = vunpack.c.l.b16 %v2962
    %v3002 = vunpack.c.l.b16 %v2963
    %v3003 = vunpack.c.l.b16 %v2964
    %v3004 = vunpack.c.l.b16 %v2965
    %v3005 = vunpack.c.l.b16 %v2966
    %v3006 = vunpack.c.l.b16 %v2967
    %v3007 = vunpack.c.l.b16 %v2968
    %v3008 = vpack.c.b16 %v2993, %v2992
    %v3009 = vpack.c.b16 %v2995, %v2994
    %v3010 = vpack.c.b16 %v2997, %v2996
    %v3011 = vpack.c.b16 %v2999, %v2998
    %v3012 = vpack.c.b16 %v3001, %v3000
    %v3013 = vpack.c.b16 %v3003, %v3002
    %v3014 = vpack.c.b16 %v3005, %v3004
    %v3015 = vpack.c.b16 %v3007, %v3006
    %3024 = vmatprep.subr.bf16.mxu0 0
    %3025 = vmatpush1.bf16.msra.mxu0 %v3008
    %3026 = vmatprep.subr.bf16.mxu0 0
    %3027 = vmatpush1.bf16.msra.mxu0 %v3009
    %3028 = vmatprep.subr.bf16.mxu0 0
    %3029 = vmatpush1.bf16.msra.mxu0 %v3010
    %3030 = vmatprep.subr.bf16.mxu0 0
    %3031 = vmatpush1.bf16.msra.mxu0 %v3011
    %3032 = vmatprep.subr.bf16.mxu0 0
    %3033 = vmatpush1.bf16.msra.mxu0 %v3012
    %3034 = vmatprep.subr.bf16.mxu0 0
    %3035 = vmatpush1.bf16.msra.mxu0 %v3013
    %3036 = vmatprep.subr.bf16.mxu0 0
    %3037 = vmatpush1.bf16.msra.mxu0 %v3014
    %3038 = vmatprep.subr.bf16.mxu0 0
    %3039 = vmatpush1.bf16.msra.mxu0 %v3015
    %3040 = vmatprep.subr.bf16.mxu0 0
    %3041 = vmatpush1.bf16.msra.mxu0 0
    %3042 = vmatprep.subr.bf16.mxu0 0
    %3043 = vmatpush1.bf16.msra.mxu0 0
    %3044 = vmatprep.subr.bf16.mxu0 0
    %3045 = vmatpush1.bf16.msra.mxu0 0
    %3046 = vmatprep.subr.bf16.mxu0 0
    %3047 = vmatpush1.bf16.msra.mxu0 0
    %3048 = vmatprep.subr.bf16.mxu0 0
    %3049 = vmatpush1.bf16.msra.mxu0 0
    %3050 = vmatprep.subr.bf16.mxu0 0
    %3051 = vmatpush1.bf16.msra.mxu0 0
    %3052 = vmatprep.subr.bf16.mxu0 0
    %3053 = vmatpush1.bf16.msra.mxu0 0
    %3054 = vmatprep.subr.bf16.mxu0 0
    %3055 = vmatpush1.bf16.msra.mxu0 0
    %3056 = vmatprep.mubr.bf16.mxu0 0
    %3057 = vmatmul.mubr.bf16.gmra.mrb[0].mxu0 %v2952
    %v3058 = vpop.f32.mrb[0].mxu0
    %v3059 = vadd.f32 %v2974, %v3058
    %v3060 = vpop.f32.mrb[0].mxu0
    %v3061 = vpop.f32.mrb[0].mxu0
    %v3062 = vpop.f32.mrb[0].mxu0
    %3063 = vdwg.mxu0
    %vm3064 = vcmask 25600
    %3065 = vst.msk [vmem:[#allocation2] sm:$0x3] %vm3064, %v3059
    // Predicated region
    $region46: #{dqn_forward.1} parent=1 // pred_check
      _
    $region47: #{dqn_forward.1} parent=1 // pred_check_branch
      %3067 = sbr.rel (0) target = $region49
    $region48: #{dqn_forward.1} parent=1 // pred_region
      %s3069 = ssub.s32 32, 32
      %3070 = vsyncadd [#allocation3], %s3069
      %s3072 = sshll.u32 [#allocation2], 4
      %s3073 = int_to_ptr.vmem [resolvable:$true] %s3072
      %3075 = dma.vmem_to_hbm [thread:$0]  %s3073, 32, %s11, [#allocation3]
    $region49: #{dqn_forward.1} parent=1 // pred_fallthru
      _
    // Predicated region
    $region50: #{dqn_forward.1} parent=1 // pred_check
      _
    $region51: #{dqn_forward.1} parent=1 // pred_check_branch
      %3077 = sbr.rel (0) target = $region53
    $region52: #{dqn_forward.1} parent=1 // pred_region
      %3078 = dma.done [#allocation3], 32
    $region53: #{dqn_forward.1} parent=1 // pred_fallthru
      _
    %3079 = vsyncpa [#allocation3], 1

</llo_original>
